<compile_context>
chip_gen: v6e
topology: v6e:2x2x1
jax: 0.10.0
libtpu: 0.0.40
codegen_flags: <defaults>
</compile_context>

<pallas_src>
import functools

import jax
import jax.numpy as jnp
from jax.experimental import pallas as pl
from jax.experimental.pallas import tpu as pltpu


def _round_up(x, m):
    return ((x + m - 1) // m) * m


# ----------------------------------------------------------------------------
# Hoisted input projection:  (T*B, F) @ (F, 4H) + b   as one big MXU matmul.
# ----------------------------------------------------------------------------
def _inproj_kernel(x_ref, w_ref, b_ref, o_ref):
    o_ref[...] = (
        jnp.dot(x_ref[...], w_ref[...], preferred_element_type=jnp.float32)
        + b_ref[...]
    )


def input_projection(x2d, w_t, bias):
    """x2d: (M, F); w_t: (F, 4H); bias: (1, 4H) -> (M, 4H)."""
    M, F = x2d.shape
    N = w_t.shape[1]
    # Pick an M tile that divides M (small test sizes -> single block).
    tm = M
    for cand in (512, 256, 128):
        if M % cand == 0:
            tm = cand
            break
    grid = (M // tm,)
    return pl.pallas_call(
        _inproj_kernel,
        out_shape=jax.ShapeDtypeStruct((M, N), jnp.float32),
        grid_spec=pltpu.PrefetchScalarGridSpec(
            num_scalar_prefetch=0,
            grid=grid,
            in_specs=[
                pl.BlockSpec((tm, F), lambda i: (i, 0)),
                pl.BlockSpec((F, N), lambda i: (0, 0)),
                pl.BlockSpec((1, N), lambda i: (0, 0)),
            ],
            out_specs=pl.BlockSpec((tm, N), lambda i: (i, 0)),
        ),
        # Non-recurrent matmul: mark parallel so v7x can shard it across TCs.
        compiler_params=pltpu.CompilerParams(
            dimension_semantics=("parallel",)),
    )(x2d, w_t, bias)


# ----------------------------------------------------------------------------
# Fused recurrent kernel: layer-1 LSTM + ReLU + layer-2 LSTM + ReLU + Linear.
# Grid over time; all carries live in VMEM scratch for the whole sequence.
# ----------------------------------------------------------------------------
def _fused_stepper_kernel(g1_ref, h0_ref, c0_ref,
                          whh1_ref, wih2_ref, whh2_ref, b2_ref,
                          wp_ref, bp_ref,
                          pred_ref, h2T_ref, c2T_ref,
                          h1_s, c1_s, h2_s, c2_s):
    t = pl.program_id(0)
    H = h1_s.shape[-1]

    @pl.when(t == 0)
    def _init():
        h1_s[...] = h0_ref[0]
        c1_s[...] = c0_ref[0]
        h2_s[...] = jnp.zeros_like(h2_s)
        c2_s[...] = jnp.zeros_like(c2_s)

    # ---------------- layer 1 (input projection already hoisted) ------------
    gates1 = g1_ref[0] + jnp.dot(
        h1_s[...], whh1_ref[...], preferred_element_type=jnp.float32)  # (B,4H)
    # Gate slices are lane-aligned when H % 128 == 0 (production H=512).
    i1 = jax.nn.sigmoid(gates1[:, 0 * H:1 * H])
    f1 = jax.nn.sigmoid(gates1[:, 1 * H:2 * H])
    g1 = jnp.tanh(gates1[:, 2 * H:3 * H])
    o1 = jax.nn.sigmoid(gates1[:, 3 * H:4 * H])
    c1_new = f1 * c1_s[...] + i1 * g1
    h1_new = o1 * jnp.tanh(c1_new)
    h1_s[...] = h1_new
    c1_s[...] = c1_new
    a1 = jnp.maximum(h1_new, 0.0)                     # ReLU fused, stays in VMEM

    # ---------------- layer 2 ------------------------------------------------
    gates2 = (
        jnp.dot(a1, wih2_ref[...], preferred_element_type=jnp.float32)
        + jnp.dot(h2_s[...], whh2_ref[...], preferred_element_type=jnp.float32)
        + b2_ref[...]
    )                                                 # (B, 4H)
    i2 = jax.nn.sigmoid(gates2[:, 0 * H:1 * H])
    f2 = jax.nn.sigmoid(gates2[:, 1 * H:2 * H])
    g2 = jnp.tanh(gates2[:, 2 * H:3 * H])
    o2 = jax.nn.sigmoid(gates2[:, 3 * H:4 * H])
    c2_new = f2 * c2_s[...] + i2 * g2
    h2_new = o2 * jnp.tanh(c2_new)
    h2_s[...] = h2_new
    c2_s[...] = c2_new
    a2 = jnp.maximum(h2_new, 0.0)                     # ReLU fused

    # ---------------- final Linear, lane-dense (O padded to 128) -------------
    pred_ref[0] = (
        jnp.dot(a2, wp_ref[...], preferred_element_type=jnp.float32)
        + bp_ref[...]
    )

    @pl.when(t == pl.num_programs(0) - 1)
    def _final():
        h2T_ref[0] = h2_new
        c2T_ref[0] = c2_new


def fused_stepper(gates_in1, h0, c0, whh1_t, wih2_t, whh2_t, b2,
                  wp_t_pad, bp_pad):
    """gates_in1: (T, B, 4H); h0/c0: (1, B, H); weights pre-transposed."""
    T, B, G = gates_in1.shape
    H = G // 4
    O_pad = wp_t_pad.shape[1]

    out_shapes = (
        jax.ShapeDtypeStruct((T, B, O_pad), jnp.float32),   # padded predictions
        jax.ShapeDtypeStruct((1, B, H), jnp.float32),       # h2_T
        jax.ShapeDtypeStruct((1, B, H), jnp.float32),       # c2_T
    )

    grid_spec = pltpu.PrefetchScalarGridSpec(
        num_scalar_prefetch=0,
        grid=(T,),
        in_specs=[
            pl.BlockSpec((1, B, G), lambda t: (t, 0, 0)),    # gates_in1[t]
            pl.BlockSpec((1, B, H), lambda t: (0, 0, 0)),    # h0 (layer 1)
            pl.BlockSpec((1, B, H), lambda t: (0, 0, 0)),    # c0 (layer 1)
            pl.BlockSpec((H, G), lambda t: (0, 0)),          # W_hh1^T
            pl.BlockSpec((H, G), lambda t: (0, 0)),          # W_ih2^T
            pl.BlockSpec((H, G), lambda t: (0, 0)),          # W_hh2^T
            pl.BlockSpec((1, G), lambda t: (0, 0)),          # bias layer 2
            pl.BlockSpec((H, O_pad), lambda t: (0, 0)),      # W_pred^T (padded)
            pl.BlockSpec((1, O_pad), lambda t: (0, 0)),      # b_pred   (padded)
        ],
        out_specs=[
            pl.BlockSpec((1, B, O_pad), lambda t: (t, 0, 0)),
            pl.BlockSpec((1, B, H), lambda t: (0, 0, 0)),
            pl.BlockSpec((1, B, H), lambda t: (0, 0, 0)),
        ],
        scratch_shapes=[
            pltpu.VMEM((B, H), jnp.float32),   # h1 carry
            pltpu.VMEM((B, H), jnp.float32),   # c1 carry
            pltpu.VMEM((B, H), jnp.float32),   # h2 carry
            pltpu.VMEM((B, H), jnp.float32),   # c2 carry
        ],
    )

    # Rough VMEM budget: weights + double-buffered per-step blocks + headroom.
    # Explicit limit keeps the fused kernel weight-resident on v7x (64 MiB).
    weight_bytes = 4 * (3 * H * G + H * O_pad + G + O_pad)
    block_bytes = 4 * (B * G + B * O_pad + 4 * B * H)
    vmem_limit = int(min(max(2 * (weight_bytes + 2 * block_bytes) + (4 << 20),
                             16 << 20), 56 << 20))

    return pl.pallas_call(
        _fused_stepper_kernel,
        out_shape=out_shapes,
        grid_spec=grid_spec,
        compiler_params=pltpu.CompilerParams(
            dimension_semantics=("arbitrary",),   # time is a sequential carry
            vmem_limit_bytes=vmem_limit),
    )(gates_in1, h0, c0, whh1_t, wih2_t, whh2_t, b2, wp_t_pad, bp_pad)


# ----------------------------------------------------------------------------
# Stepper forward
# ----------------------------------------------------------------------------
def stepper_forward(params, x, h_t, c_t):
    T, B, F = x.shape
    H = params["w_hh1"].shape[1]
    O = params["w_pred"].shape[0]
    O_pad = _round_up(O, 128)

    # ---- hoisted layer-1 input projection: one big MXU matmul --------------
    wih1_t = jnp.transpose(params["w_ih1"])                       # (F, 4H)
    b1 = (params["b_ih1"] + params["b_hh1"]).reshape(1, 4 * H)    # (1, 4H)
    gates_in1 = input_projection(x.reshape(T * B, F), wih1_t, b1)
    gates_in1 = gates_in1.reshape(T, B, 4 * H)

    # ---- pre-transposed / padded weights for the fused recurrent kernel ----
    whh1_t = jnp.transpose(params["w_hh1"])                       # (H, 4H)
    wih2_t = jnp.transpose(params["w_ih2"])                       # (H, 4H)
    whh2_t = jnp.transpose(params["w_hh2"])                       # (H, 4H)
    b2 = (params["b_ih2"] + params["b_hh2"]).reshape(1, 4 * H)    # (1, 4H)
    wp_t_pad = jnp.zeros((H, O_pad), jnp.float32).at[:, :O].set(
        jnp.transpose(params["w_pred"]))                          # (H, O_pad)
    bp_pad = jnp.zeros((1, O_pad), jnp.float32).at[:, :O].set(
        params["b_pred"].reshape(1, O))                           # (1, O_pad)

    pred_pad, h_t2, c_t2 = fused_stepper(
        gates_in1, h_t, c_t, whh1_t, wih2_t, whh2_t, b2, wp_t_pad, bp_pad)

    pred = pred_pad[:, :, :O]        # strip lane padding in the wrapper
    return pred, h_t2, c_t2


# ----------------------------------------------------------------------------
# Pure-JAX reference (for correctness check only)
# ----------------------------------------------------------------------------
def _ref_lstm(x, h0, c0, w_ih, w_hh, b_ih, b_hh):
    H = h0.shape[-1]

    def step(carry, x_t):
        h, c = carry
        gates = x_t @ w_ih.T + b_ih + h @ w_hh.T + b_hh
        i = jax.nn.sigmoid(gates[:, 0 * H:1 * H])
        f = jax.nn.sigmoid(gates[:, 1 * H:2 * H])
        g = jnp.tanh(gates[:, 2 * H:3 * H])
        o = jax.nn.sigmoid(gates[:, 3 * H:4 * H])
        c = f * c + i * g
        h = o * jnp.tanh(c)
        return (h, c), h

    (hT, cT), ys = jax.lax.scan(step, (h0[0], c0[0]), x)
    return ys, hT[None], cT[None]


def _ref_forward(params, x, h_t, c_t):
    T, B, _ = x.shape
    H = params["w_hh1"].shape[1]
    o1, _, _ = _ref_lstm(x, h_t, c_t, params["w_ih1"], params["w_hh1"],
                         params["b_ih1"], params["b_hh1"])
    o1 = jax.nn.relu(o1)
    z = jnp.zeros((1, B, H), jnp.float32)
    o2, h2, c2 = _ref_lstm(o1, z, z, params["w_ih2"], params["w_hh2"],
                           params["b_ih2"], params["b_hh2"])
    o2 = jax.nn.relu(o2)
    pred = o2 @ params["w_pred"].T + params["b_pred"]
    return pred, h2, c2


# ----------------------------------------------------------------------------
if __name__ == "__main__":
    SEQ, BATCH = 8, 2
    N_FEATURE, N_HIDDEN, N_OUTPUT = 4, 32, 3

    key = jax.random.PRNGKey(0)
    ks = jax.random.split(key, 12)
    scale = 0.1
    params = {
        "w_ih1": scale * jax.random.normal(ks[0], (4 * N_HIDDEN, N_FEATURE), jnp.float32),
        "w_hh1": scale * jax.random.normal(ks[1], (4 * N_HIDDEN, N_HIDDEN), jnp.float32),
        "b_ih1": scale * jax.random.normal(ks[2], (4 * N_HIDDEN,), jnp.float32),
        "b_hh1": scale * jax.random.normal(ks[3], (4 * N_HIDDEN,), jnp.float32),
        "w_ih2": scale * jax.random.normal(ks[4], (4 * N_HIDDEN, N_HIDDEN), jnp.float32),
        "w_hh2": scale * jax.random.normal(ks[5], (4 * N_HIDDEN, N_HIDDEN), jnp.float32),
        "b_ih2": scale * jax.random.normal(ks[6], (4 * N_HIDDEN,), jnp.float32),
        "b_hh2": scale * jax.random.normal(ks[7], (4 * N_HIDDEN,), jnp.float32),
        "w_pred": scale * jax.random.normal(ks[8], (N_OUTPUT, N_HIDDEN), jnp.float32),
        "b_pred": scale * jax.random.normal(ks[9], (N_OUTPUT,), jnp.float32),
    }

    x = jax.random.normal(ks[10], (SEQ, BATCH, N_FEATURE), jnp.float32)
    h_t = 0.1 * jax.random.normal(ks[11], (1, BATCH, N_HIDDEN), jnp.float32)
    c_t = 0.1 * jax.random.normal(jax.random.fold_in(key, 99),
                                  (1, BATCH, N_HIDDEN), jnp.float32)

    out, h2, c2 = jax.block_until_ready(
        jax.jit(functools.partial(stepper_forward, params))(x, h_t, c_t))

    ref_out, ref_h2, ref_c2 = _ref_forward(params, x, h_t, c_t)
    assert jnp.allclose(out, ref_out, atol=1e-5, rtol=1e-5)
    assert jnp.allclose(h2, ref_h2, atol=1e-5, rtol=1e-5)
    assert jnp.allclose(c2, ref_c2, atol=1e-5, rtol=1e-5)

    print("KERNEL_OK")
</pallas_src>

<mosaic_0001>
module attributes {stable_mosaic.version = 11 : i64} {
  func.func @_inproj_kernel(%arg0: i32, %arg1: memref<16x4xf32, #tpu.memory_space<vmem>>, %arg2: memref<4x128xf32, #tpu.memory_space<vmem>>, %arg3: memref<1x128xf32, #tpu.memory_space<vmem>>, %arg4: memref<16x128xf32, #tpu.memory_space<vmem>>) attributes {dimension_semantics = [#tpu.dimension_semantics<parallel>], iteration_bounds = array<i64: 1>, scalar_prefetch = 0 : i64, scratch_operands = 0 : i64, tpu.core_type = #tpu.core_type<tc>, window_params = [{transform_indices = @transform_0, window_bounds = array<i64: 16, 4>}, {pipeline_mode = #tpu.pipeline_mode<synchronous>, transform_indices = @transform_1, window_bounds = array<i64: 4, 128>}, {pipeline_mode = #tpu.pipeline_mode<synchronous>, transform_indices = @transform_2, window_bounds = array<i64: 1, 128>}, {transform_indices = @transform_3, window_bounds = array<i64: 16, 128>}]} {
    %c0 = arith.constant 0 : index
    %c0_0 = arith.constant 0 : index
    %0 = vector.load %arg1[%c0, %c0_0] : memref<16x4xf32, #tpu.memory_space<vmem>>, vector<16x4xf32>
    %c0_1 = arith.constant 0 : index
    %c0_2 = arith.constant 0 : index
    %1 = vector.load %arg2[%c0_1, %c0_2] : memref<4x128xf32, #tpu.memory_space<vmem>>, vector<4x128xf32>
    %cst = arith.constant dense<0.000000e+00> : vector<16x128xf32>
    %2 = tpu.matmul %0, %1, %cst {dimension_numbers = #tpu.dot_dimension_numbers<[1], [0], [0], [1], [0, 0, 1, 1], [], []>} : vector<16x4xf32>, vector<4x128xf32>, vector<16x128xf32> -> vector<16x128xf32>
    %c0_3 = arith.constant 0 : index
    %c0_4 = arith.constant 0 : index
    %3 = vector.load %arg3[%c0_3, %c0_4] : memref<1x128xf32, #tpu.memory_space<vmem>>, vector<1x128xf32>
    %4 = vector.broadcast %3 : vector<1x128xf32> to vector<16x128xf32>
    %5 = arith.addf %2, %4 : vector<16x128xf32>
    %c0_5 = arith.constant 0 : index
    %c0_6 = arith.constant 0 : index
    %6 = vector.load %arg4[%c0_5, %c0_6] : memref<16x128xf32, #tpu.memory_space<vmem>>, vector<16x128xf32>
    tpu.vector_store %arg4[%c0_5, %c0_6], %5 {strides = array<i32>} : memref<16x128xf32, #tpu.memory_space<vmem>>, vector<16x128xf32>,
    return
  }
  func.func @transform_0(%arg0: i32) -> (i32, i32) {
    %c0_i32 = arith.constant 0 : i32
    %c0_i32_0 = arith.constant 0 : i32
    return %arg0, %c0_i32 : i32, i32
  }
  func.func @transform_1(%arg0: i32) -> (i32, i32) {
    %c0_i32 = arith.constant 0 : i32
    %c0_i32_0 = arith.constant 0 : i32
    %c0_i32_1 = arith.constant 0 : i32
    return %c0_i32, %c0_i32_0 : i32, i32
  }
  func.func @transform_2(%arg0: i32) -> (i32, i32) {
    %c0_i32 = arith.constant 0 : i32
    %c0_i32_0 = arith.constant 0 : i32
    %c0_i32_1 = arith.constant 0 : i32
    return %c0_i32, %c0_i32_0 : i32, i32
  }
  func.func @transform_3(%arg0: i32) -> (i32, i32) {
    %c0_i32 = arith.constant 0 : i32
    %c0_i32_0 = arith.constant 0 : i32
    return %arg0, %c0_i32 : i32, i32
  }
}

module attributes {stable_mosaic.version = 11 : i64} {
  func.func @_fused_stepper_kernel(%arg0: i32, %arg1: memref<1x2x128xf32, #tpu.memory_space<vmem>>, %arg2: memref<1x2x32xf32, #tpu.memory_space<vmem>>, %arg3: memref<1x2x32xf32, #tpu.memory_space<vmem>>, %arg4: memref<32x128xf32, #tpu.memory_space<vmem>>, %arg5: memref<32x128xf32, #tpu.memory_space<vmem>>, %arg6: memref<32x128xf32, #tpu.memory_space<vmem>>, %arg7: memref<1x128xf32, #tpu.memory_space<vmem>>, %arg8: memref<32x128xf32, #tpu.memory_space<vmem>>, %arg9: memref<1x128xf32, #tpu.memory_space<vmem>>, %arg10: memref<1x2x128xf32, #tpu.memory_space<vmem>>, %arg11: memref<1x2x32xf32, #tpu.memory_space<vmem>>, %arg12: memref<1x2x32xf32, #tpu.memory_space<vmem>>, %arg13: memref<2x32xf32, #tpu.memory_space<vmem>>, %arg14: memref<2x32xf32, #tpu.memory_space<vmem>>, %arg15: memref<2x32xf32, #tpu.memory_space<vmem>>, %arg16: memref<2x32xf32, #tpu.memory_space<vmem>>) attributes {dimension_semantics = [#tpu.dimension_semantics<arbitrary>], iteration_bounds = array<i64: 8>, scalar_prefetch = 0 : i64, scratch_operands = 4 : i64, tpu.core_type = #tpu.core_type<tc>, window_params = [{transform_indices = @transform_0, window_bounds = array<i64: 1, 2, 128>}, {pipeline_mode = #tpu.pipeline_mode<synchronous>, transform_indices = @transform_1, window_bounds = array<i64: 1, 2, 32>}, {pipeline_mode = #tpu.pipeline_mode<synchronous>, transform_indices = @transform_2, window_bounds = array<i64: 1, 2, 32>}, {pipeline_mode = #tpu.pipeline_mode<synchronous>, transform_indices = @transform_3, window_bounds = array<i64: 32, 128>}, {pipeline_mode = #tpu.pipeline_mode<synchronous>, transform_indices = @transform_4, window_bounds = array<i64: 32, 128>}, {pipeline_mode = #tpu.pipeline_mode<synchronous>, transform_indices = @transform_5, window_bounds = array<i64: 32, 128>}, {pipeline_mode = #tpu.pipeline_mode<synchronous>, transform_indices = @transform_6, window_bounds = array<i64: 1, 128>}, {pipeline_mode = #tpu.pipeline_mode<synchronous>, transform_indices = @transform_7, window_bounds = array<i64: 32, 128>}, {pipeline_mode = #tpu.pipeline_mode<synchronous>, transform_indices = @transform_8, window_bounds = array<i64: 1, 128>}, {transform_indices = @transform_9, window_bounds = array<i64: 1, 2, 128>}, {pipeline_mode = #tpu.pipeline_mode<synchronous>, transform_indices = @transform_10, window_bounds = array<i64: 1, 2, 32>}, {pipeline_mode = #tpu.pipeline_mode<synchronous>, transform_indices = @transform_11, window_bounds = array<i64: 1, 2, 32>}]} {
    %c0_i32 = arith.constant 0 : i32
    %0 = arith.cmpi eq, %arg0, %c0_i32 : i32
    %1 = arith.extui %0 : i1 to i32
    %c0_i32_0 = arith.constant 0 : i32
    %2 = arith.cmpi ne, %1, %c0_i32_0 : i32
    scf.if %2 {
      %c0_46 = arith.constant 0 : index
      %c0_47 = arith.constant 0 : index
      %c0_48 = arith.constant 0 : index
      %89 = vector.load %arg2[%c0_46, %c0_47, %c0_48] : memref<1x2x32xf32, #tpu.memory_space<vmem>>, vector<1x2x32xf32>
      %90 = vector.shape_cast %89 : vector<1x2x32xf32> to vector<2x32xf32>
      %c0_49 = arith.constant 0 : index
      %c0_50 = arith.constant 0 : index
      %91 = vector.load %arg13[%c0_49, %c0_50] : memref<2x32xf32, #tpu.memory_space<vmem>>, vector<2x32xf32>
      tpu.vector_store %arg13[%c0_49, %c0_50], %90 {strides = array<i32>} : memref<2x32xf32, #tpu.memory_space<vmem>>, vector<2x32xf32>,
      %c0_51 = arith.constant 0 : index
      %c0_52 = arith.constant 0 : index
      %c0_53 = arith.constant 0 : index
      %92 = vector.load %arg3[%c0_51, %c0_52, %c0_53] : memref<1x2x32xf32, #tpu.memory_space<vmem>>, vector<1x2x32xf32>
      %93 = vector.shape_cast %92 : vector<1x2x32xf32> to vector<2x32xf32>
      %c0_54 = arith.constant 0 : index
      %c0_55 = arith.constant 0 : index
      %94 = vector.load %arg14[%c0_54, %c0_55] : memref<2x32xf32, #tpu.memory_space<vmem>>, vector<2x32xf32>
      tpu.vector_store %arg14[%c0_54, %c0_55], %93 {strides = array<i32>} : memref<2x32xf32, #tpu.memory_space<vmem>>, vector<2x32xf32>,
      %cst_56 = arith.constant 0.000000e+00 : f32
      %95 = vector.broadcast %cst_56 : f32 to vector<2x32xf32>
      %c0_57 = arith.constant 0 : index
      %c0_58 = arith.constant 0 : index
      %96 = vector.load %arg15[%c0_57, %c0_58] : memref<2x32xf32, #tpu.memory_space<vmem>>, vector<2x32xf32>
      tpu.vector_store %arg15[%c0_57, %c0_58], %95 {strides = array<i32>} : memref<2x32xf32, #tpu.memory_space<vmem>>, vector<2x32xf32>,
      %cst_59 = arith.constant 0.000000e+00 : f32
      %97 = vector.broadcast %cst_59 : f32 to vector<2x32xf32>
      %c0_60 = arith.constant 0 : index
      %c0_61 = arith.constant 0 : index
      %98 = vector.load %arg16[%c0_60, %c0_61] : memref<2x32xf32, #tpu.memory_space<vmem>>, vector<2x32xf32>
      tpu.vector_store %arg16[%c0_60, %c0_61], %97 {strides = array<i32>} : memref<2x32xf32, #tpu.memory_space<vmem>>, vector<2x32xf32>,
    } else {
    }
    %c0 = arith.constant 0 : index
    %c0_1 = arith.constant 0 : index
    %c0_2 = arith.constant 0 : index
    %3 = vector.load %arg1[%c0, %c0_1, %c0_2] : memref<1x2x128xf32, #tpu.memory_space<vmem>>, vector<1x2x128xf32>
    %4 = vector.shape_cast %3 : vector<1x2x128xf32> to vector<2x128xf32>
    %c0_3 = arith.constant 0 : index
    %c0_4 = arith.constant 0 : index
    %5 = vector.load %arg13[%c0_3, %c0_4] : memref<2x32xf32, #tpu.memory_space<vmem>>, vector<2x32xf32>
    %c0_5 = arith.constant 0 : index
    %c0_6 = arith.constant 0 : index
    %6 = vector.load %arg4[%c0_5, %c0_6] : memref<32x128xf32, #tpu.memory_space<vmem>>, vector<32x128xf32>
    %cst = arith.constant dense<0.000000e+00> : vector<2x128xf32>
    %7 = tpu.matmul %5, %6, %cst {dimension_numbers = #tpu.dot_dimension_numbers<[1], [0], [0], [1], [0, 0, 1, 1], [], []>} : vector<2x32xf32>, vector<32x128xf32>, vector<2x128xf32> -> vector<2x128xf32>
    %8 = arith.addf %4, %7 : vector<2x128xf32>
    %9 = vector.extract_strided_slice %8 {offsets = [0, 0], sizes = [2, 32], strides = [1, 1]} : vector<2x128xf32> to vector<2x32xf32>
    %10 = arith.negf %9 : vector<2x32xf32>
    %11 = math.exp %10 : vector<2x32xf32>
    %cst_7 = arith.constant 1.000000e+00 : f32
    %12 = vector.broadcast %cst_7 : f32 to vector<2x32xf32>
    %13 = arith.addf %12, %11 : vector<2x32xf32>
    %14 = arith.divf %12, %13 : vector<2x32xf32>
    %15 = vector.extract_strided_slice %8 {offsets = [0, 32], sizes = [2, 32], strides = [1, 1]} : vector<2x128xf32> to vector<2x32xf32>
    %16 = arith.negf %15 : vector<2x32xf32>
    %17 = math.exp %16 : vector<2x32xf32>
    %cst_8 = arith.constant 1.000000e+00 : f32
    %18 = vector.broadcast %cst_8 : f32 to vector<2x32xf32>
    %19 = arith.addf %18, %17 : vector<2x32xf32>
    %20 = arith.divf %18, %19 : vector<2x32xf32>
    %21 = vector.extract_strided_slice %8 {offsets = [0, 64], sizes = [2, 32], strides = [1, 1]} : vector<2x128xf32> to vector<2x32xf32>
    %22 = math.tanh %21 : vector<2x32xf32>
    %23 = vector.extract_strided_slice %8 {offsets = [0, 96], sizes = [2, 32], strides = [1, 1]} : vector<2x128xf32> to vector<2x32xf32>
    %24 = arith.negf %23 : vector<2x32xf32>
    %25 = math.exp %24 : vector<2x32xf32>
    %cst_9 = arith.constant 1.000000e+00 : f32
    %26 = vector.broadcast %cst_9 : f32 to vector<2x32xf32>
    %27 = arith.addf %26, %25 : vector<2x32xf32>
    %28 = arith.divf %26, %27 : vector<2x32xf32>
    %c0_10 = arith.constant 0 : index
    %c0_11 = arith.constant 0 : index
    %29 = vector.load %arg14[%c0_10, %c0_11] : memref<2x32xf32, #tpu.memory_space<vmem>>, vector<2x32xf32>
    %30 = arith.mulf %20, %29 : vector<2x32xf32>
    %31 = arith.mulf %14, %22 : vector<2x32xf32>
    %32 = arith.addf %30, %31 : vector<2x32xf32>
    %33 = math.tanh %32 : vector<2x32xf32>
    %34 = arith.mulf %28, %33 : vector<2x32xf32>
    %c0_12 = arith.constant 0 : index
    %c0_13 = arith.constant 0 : index
    %35 = vector.load %arg13[%c0_12, %c0_13] : memref<2x32xf32, #tpu.memory_space<vmem>>, vector<2x32xf32>
    tpu.vector_store %arg13[%c0_12, %c0_13], %34 {strides = array<i32>} : memref<2x32xf32, #tpu.memory_space<vmem>>, vector<2x32xf32>,
    %c0_14 = arith.constant 0 : index
    %c0_15 = arith.constant 0 : index
    %36 = vector.load %arg14[%c0_14, %c0_15] : memref<2x32xf32, #tpu.memory_space<vmem>>, vector<2x32xf32>
    tpu.vector_store %arg14[%c0_14, %c0_15], %32 {strides = array<i32>} : memref<2x32xf32, #tpu.memory_space<vmem>>, vector<2x32xf32>,
    %cst_16 = arith.constant 0.000000e+00 : f32
    %37 = vector.broadcast %cst_16 : f32 to vector<2x32xf32>
    %38 = arith.maximumf %34, %37 : vector<2x32xf32>
    %c0_17 = arith.constant 0 : index
    %c0_18 = arith.constant 0 : index
    %39 = vector.load %arg5[%c0_17, %c0_18] : memref<32x128xf32, #tpu.memory_space<vmem>>, vector<32x128xf32>
    %cst_19 = arith.constant dense<0.000000e+00> : vector<2x128xf32>
    %40 = tpu.matmul %38, %39, %cst_19 {dimension_numbers = #tpu.dot_dimension_numbers<[1], [0], [0], [1], [0, 0, 1, 1], [], []>} : vector<2x32xf32>, vector<32x128xf32>, vector<2x128xf32> -> vector<2x128xf32>
    %c0_20 = arith.constant 0 : index
    %c0_21 = arith.constant 0 : index
    %41 = vector.load %arg15[%c0_20, %c0_21] : memref<2x32xf32, #tpu.memory_space<vmem>>, vector<2x32xf32>
    %c0_22 = arith.constant 0 : index
    %c0_23 = arith.constant 0 : index
    %42 = vector.load %arg6[%c0_22, %c0_23] : memref<32x128xf32, #tpu.memory_space<vmem>>, vector<32x128xf32>
    %cst_24 = arith.constant dense<0.000000e+00> : vector<2x128xf32>
    %43 = tpu.matmul %41, %42, %cst_24 {dimension_numbers = #tpu.dot_dimension_numbers<[1], [0], [0], [1], [0, 0, 1, 1], [], []>} : vector<2x32xf32>, vector<32x128xf32>, vector<2x128xf32> -> vector<2x128xf32>
    %44 = arith.addf %40, %43 : vector<2x128xf32>
    %c0_25 = arith.constant 0 : index
    %c0_26 = arith.constant 0 : index
    %45 = vector.load %arg7[%c0_25, %c0_26] : memref<1x128xf32, #tpu.memory_space<vmem>>, vector<1x128xf32>
    %46 = vector.broadcast %45 : vector<1x128xf32> to vector<2x128xf32>
    %47 = arith.addf %44, %46 : vector<2x128xf32>
    %48 = vector.extract_strided_slice %47 {offsets = [0, 0], sizes = [2, 32], strides = [1, 1]} : vector<2x128xf32> to vector<2x32xf32>
    %49 = arith.negf %48 : vector<2x32xf32>
    %50 = math.exp %49 : vector<2x32xf32>
    %cst_27 = arith.constant 1.000000e+00 : f32
    %51 = vector.broadcast %cst_27 : f32 to vector<2x32xf32>
    %52 = arith.addf %51, %50 : vector<2x32xf32>
    %53 = arith.divf %51, %52 : vector<2x32xf32>
    %54 = vector.extract_strided_slice %47 {offsets = [0, 32], sizes = [2, 32], strides = [1, 1]} : vector<2x128xf32> to vector<2x32xf32>
    %55 = arith.negf %54 : vector<2x32xf32>
    %56 = math.exp %55 : vector<2x32xf32>
    %cst_28 = arith.constant 1.000000e+00 : f32
    %57 = vector.broadcast %cst_28 : f32 to vector<2x32xf32>
    %58 = arith.addf %57, %56 : vector<2x32xf32>
    %59 = arith.divf %57, %58 : vector<2x32xf32>
    %60 = vector.extract_strided_slice %47 {offsets = [0, 64], sizes = [2, 32], strides = [1, 1]} : vector<2x128xf32> to vector<2x32xf32>
    %61 = math.tanh %60 : vector<2x32xf32>
    %62 = vector.extract_strided_slice %47 {offsets = [0, 96], sizes = [2, 32], strides = [1, 1]} : vector<2x128xf32> to vector<2x32xf32>
    %63 = arith.negf %62 : vector<2x32xf32>
    %64 = math.exp %63 : vector<2x32xf32>
    %cst_29 = arith.constant 1.000000e+00 : f32
    %65 = vector.broadcast %cst_29 : f32 to vector<2x32xf32>
    %66 = arith.addf %65, %64 : vector<2x32xf32>
    %67 = arith.divf %65, %66 : vector<2x32xf32>
    %c0_30 = arith.constant 0 : index
    %c0_31 = arith.constant 0 : index
    %68 = vector.load %arg16[%c0_30, %c0_31] : memref<2x32xf32, #tpu.memory_space<vmem>>, vector<2x32xf32>
    %69 = arith.mulf %59, %68 : vector<2x32xf32>
    %70 = arith.mulf %53, %61 : vector<2x32xf32>
    %71 = arith.addf %69, %70 : vector<2x32xf32>
    %72 = math.tanh %71 : vector<2x32xf32>
    %73 = arith.mulf %67, %72 : vector<2x32xf32>
    %c0_32 = arith.constant 0 : index
    %c0_33 = arith.constant 0 : index
    %74 = vector.load %arg15[%c0_32, %c0_33] : memref<2x32xf32, #tpu.memory_space<vmem>>, vector<2x32xf32>
    tpu.vector_store %arg15[%c0_32, %c0_33], %73 {strides = array<i32>} : memref<2x32xf32, #tpu.memory_space<vmem>>, vector<2x32xf32>,
    %c0_34 = arith.constant 0 : index
    %c0_35 = arith.constant 0 : index
    %75 = vector.load %arg16[%c0_34, %c0_35] : memref<2x32xf32, #tpu.memory_space<vmem>>, vector<2x32xf32>
    tpu.vector_store %arg16[%c0_34, %c0_35], %71 {strides = array<i32>} : memref<2x32xf32, #tpu.memory_space<vmem>>, vector<2x32xf32>,
    %cst_36 = arith.constant 0.000000e+00 : f32
    %76 = vector.broadcast %cst_36 : f32 to vector<2x32xf32>
    %77 = arith.maximumf %73, %76 : vector<2x32xf32>
    %c0_37 = arith.constant 0 : index
    %c0_38 = arith.constant 0 : index
    %78 = vector.load %arg8[%c0_37, %c0_38] : memref<32x128xf32, #tpu.memory_space<vmem>>, vector<32x128xf32>
    %cst_39 = arith.constant dense<0.000000e+00> : vector<2x128xf32>
    %79 = tpu.matmul %77, %78, %cst_39 {dimension_numbers = #tpu.dot_dimension_numbers<[1], [0], [0], [1], [0, 0, 1, 1], [], []>} : vector<2x32xf32>, vector<32x128xf32>, vector<2x128xf32> -> vector<2x128xf32>
    %c0_40 = arith.constant 0 : index
    %c0_41 = arith.constant 0 : index
    %80 = vector.load %arg9[%c0_40, %c0_41] : memref<1x128xf32, #tpu.memory_space<vmem>>, vector<1x128xf32>
    %81 = vector.broadcast %80 : vector<1x128xf32> to vector<2x128xf32>
    %82 = arith.addf %79, %81 : vector<2x128xf32>
    %c0_42 = arith.constant 0 : index
    %c0_43 = arith.constant 0 : index
    %c0_44 = arith.constant 0 : index
    %83 = vector.load %arg10[%c0_42, %c0_43, %c0_44] : memref<1x2x128xf32, #tpu.memory_space<vmem>>, vector<1x2x128xf32>
    %84 = vector.shape_cast %83 : vector<1x2x128xf32> to vector<2x128xf32>
    %85 = vector.shape_cast %82 : vector<2x128xf32> to vector<1x2x128xf32>
    tpu.vector_store %arg10[%c0_42, %c0_43, %c0_44], %85 {strides = array<i32>} : memref<1x2x128xf32, #tpu.memory_space<vmem>>, vector<1x2x128xf32>,
    %c7_i32 = arith.constant 7 : i32
    %86 = arith.cmpi eq, %arg0, %c7_i32 : i32
    %87 = arith.extui %86 : i1 to i32
    %c0_i32_45 = arith.constant 0 : i32
    %88 = arith.cmpi ne, %87, %c0_i32_45 : i32
    scf.if %88 {
      %c0_46 = arith.constant 0 : index
      %c0_47 = arith.constant 0 : index
      %c0_48 = arith.constant 0 : index
      %89 = vector.load %arg11[%c0_46, %c0_47, %c0_48] : memref<1x2x32xf32, #tpu.memory_space<vmem>>, vector<1x2x32xf32>
      %90 = vector.shape_cast %89 : vector<1x2x32xf32> to vector<2x32xf32>
      %91 = vector.shape_cast %73 : vector<2x32xf32> to vector<1x2x32xf32>
      tpu.vector_store %arg11[%c0_46, %c0_47, %c0_48], %91 {strides = array<i32>} : memref<1x2x32xf32, #tpu.memory_space<vmem>>, vector<1x2x32xf32>,
      %c0_49 = arith.constant 0 : index
      %c0_50 = arith.constant 0 : index
      %c0_51 = arith.constant 0 : index
      %92 = vector.load %arg12[%c0_49, %c0_50, %c0_51] : memref<1x2x32xf32, #tpu.memory_space<vmem>>, vector<1x2x32xf32>
      %93 = vector.shape_cast %92 : vector<1x2x32xf32> to vector<2x32xf32>
      %94 = vector.shape_cast %71 : vector<2x32xf32> to vector<1x2x32xf32>
      tpu.vector_store %arg12[%c0_49, %c0_50, %c0_51], %94 {strides = array<i32>} : memref<1x2x32xf32, #tpu.memory_space<vmem>>, vector<1x2x32xf32>,
    } else {
    }
    return
  }
  func.func @transform_0(%arg0: i32) -> (i32, i32, i32) {
    %c0_i32 = arith.constant 0 : i32
    %c0_i32_0 = arith.constant 0 : i32
    %c0_i32_1 = arith.constant 0 : i32
    return %arg0, %c0_i32, %c0_i32_0 : i32, i32, i32
  }
  func.func @transform_1(%arg0: i32) -> (i32, i32, i32) {
    %c0_i32 = arith.constant 0 : i32
    %c0_i32_0 = arith.constant 0 : i32
    %c0_i32_1 = arith.constant 0 : i32
    %c0_i32_2 = arith.constant 0 : i32
    return %c0_i32, %c0_i32_0, %c0_i32_1 : i32, i32, i32
  }
  func.func @transform_2(%arg0: i32) -> (i32, i32, i32) {
    %c0_i32 = arith.constant 0 : i32
    %c0_i32_0 = arith.constant 0 : i32
    %c0_i32_1 = arith.constant 0 : i32
    %c0_i32_2 = arith.constant 0 : i32
    return %c0_i32, %c0_i32_0, %c0_i32_1 : i32, i32, i32
  }
  func.func @transform_3(%arg0: i32) -> (i32, i32) {
    %c0_i32 = arith.constant 0 : i32
    %c0_i32_0 = arith.constant 0 : i32
    %c0_i32_1 = arith.constant 0 : i32
    return %c0_i32, %c0_i32_0 : i32, i32
  }
  func.func @transform_4(%arg0: i32) -> (i32, i32) {
    %c0_i32 = arith.constant 0 : i32
    %c0_i32_0 = arith.constant 0 : i32
    %c0_i32_1 = arith.constant 0 : i32
    return %c0_i32, %c0_i32_0 : i32, i32
  }
  func.func @transform_5(%arg0: i32) -> (i32, i32) {
    %c0_i32 = arith.constant 0 : i32
    %c0_i32_0 = arith.constant 0 : i32
    %c0_i32_1 = arith.constant 0 : i32
    return %c0_i32, %c0_i32_0 : i32, i32
  }
  func.func @transform_6(%arg0: i32) -> (i32, i32) {
    %c0_i32 = arith.constant 0 : i32
    %c0_i32_0 = arith.constant 0 : i32
    %c0_i32_1 = arith.constant 0 : i32
    return %c0_i32, %c0_i32_0 : i32, i32
  }
  func.func @transform_7(%arg0: i32) -> (i32, i32) {
    %c0_i32 = arith.constant 0 : i32
    %c0_i32_0 = arith.constant 0 : i32
    %c0_i32_1 = arith.constant 0 : i32
    return %c0_i32, %c0_i32_0 : i32, i32
  }
  func.func @transform_8(%arg0: i32) -> (i32, i32) {
    %c0_i32 = arith.constant 0 : i32
    %c0_i32_0 = arith.constant 0 : i32
    %c0_i32_1 = arith.constant 0 : i32
    return %c0_i32, %c0_i32_0 : i32, i32
  }
  func.func @transform_9(%arg0: i32) -> (i32, i32, i32) {
    %c0_i32 = arith.constant 0 : i32
    %c0_i32_0 = arith.constant 0 : i32
    %c0_i32_1 = arith.constant 0 : i32
    return %arg0, %c0_i32, %c0_i32_0 : i32, i32, i32
  }
  func.func @transform_10(%arg0: i32) -> (i32, i32, i32) {
    %c0_i32 = arith.constant 0 : i32
    %c0_i32_0 = arith.constant 0 : i32
    %c0_i32_1 = arith.constant 0 : i32
    %c0_i32_2 = arith.constant 0 : i32
    return %c0_i32, %c0_i32_0, %c0_i32_1 : i32, i32, i32
  }
  func.func @transform_11(%arg0: i32) -> (i32, i32, i32) {
    %c0_i32 = arith.constant 0 : i32
    %c0_i32_0 = arith.constant 0 : i32
    %c0_i32_1 = arith.constant 0 : i32
    %c0_i32_2 = arith.constant 0 : i32
    return %c0_i32, %c0_i32_0, %c0_i32_1 : i32, i32, i32
  }
}

</mosaic_0001>

<llo_original>
// kernel: stepper_forward.2
$region0: #{stepper_forward.2}
  #allocation0 [shape = 'u32[]', space=smem, size = 0x4, offset = 0x4, fixed_abs, tag = 'smem constant byte address 0x4 - core index']
  #allocation1 [shape = 'u32[144,128]{1,0:T(1,128)}', space=vmem, size = 0x12000, scoped, tag = 'internal scratch']
  %s0 = inlined_call_operand.vmem [shape: f32[16,4], index: 0, kind: input, shape index: {}]
  %s1 = inlined_call_operand.vmem [shape: f32[4,128], index: 1, kind: input, shape index: {}]
  %s2 = inlined_call_operand.vmem [shape: f32[1,128], index: 2, kind: input, shape index: {}]
  %s3 = inlined_call_operand.vmem [shape: f32[16,128], index: 3, kind: output, shape index: {}]
  %s4 = sld [smem:[#allocation0]]
  $region22: #{stepper_forward.2} parent=0
    _
  %s6 = ssub.s32 1, %s4
  %s7 = scalar_select 0, %s6, %s4
  // Predicated region
  $region2: #{stepper_forward.2} parent=0 // pred_check
    _
  $region3: #{stepper_forward.2} parent=0 // pred_check_branch
    %9 = sbr.rel (0) target = $region5
  $region4: #{stepper_forward.2} parent=0 // pred_region
    _
  $region5: #{stepper_forward.2} parent=0 // pred_fallthru
    _
  // Predicated region
  $region6: #{stepper_forward.2} parent=0 // pred_check
    _
  $region7: #{stepper_forward.2} parent=0 // pred_check_branch
    %11 = sbr.rel (0) target = $region9
  $region8: #{stepper_forward.2} parent=0 // pred_region
    _
  $region9: #{stepper_forward.2} parent=0 // pred_fallthru
    _
  // Predicated region
  $region10: #{stepper_forward.2} parent=0 // pred_check
    _
  $region11: #{stepper_forward.2} parent=0 // pred_check_branch
    %13 = sbr.rel (0) target = $region13
  $region12: #{stepper_forward.2} parent=0 // pred_region
    _
  $region13: #{stepper_forward.2} parent=0 // pred_fallthru
    _
  %v14 = vld [vmem:[%s0] sm:$0xff]
  %v15 = vld [vmem:[%s0 + $0x8] sm:$0xff]
  %v16 = vld [vmem:[%s1] sm:$0xf]
  %v17 = vld [vmem:[%s2] sm:$0x1]
  %v19 = vlaneseq
  %v20 = vshrl.u32 %v19, 7
  %v21 = vsub.s32 0, %v20
  %v22 = vrot.slane %v17, %v21
  %vm24 = vcmask 31744
  %v26 = vsel %vm24, %v14, 0
  %v29 = vsel %vm24, %v15, 0
  %vm31 = vcmask 1043456
  %v33 = vsel %vm31, %v16, 0
  %35 = vmatprep.subr.mxu0 0.0
  %36 = vmatpush1.msra.mxu0 0.0
  %37 = vmatprep.subr.mxu0 0.0
  %38 = vmatpush1.msra.mxu0 0.0
  %39 = vmatprep.subr.mxu0 0.0
  %40 = vmatpush1.msra.mxu0 0.0
  %41 = vmatprep.subr.mxu0 0.0
  %42 = vmatpush1.msra.mxu0 0.0
  %43 = vmatprep.subr.mxu0 0.0
  %44 = vmatpush1.msra.mxu0 0.0
  %45 = vmatprep.subr.mxu0 0.0
  %46 = vmatpush1.msra.mxu0 0.0
  %47 = vmatprep.subr.mxu0 0.0
  %48 = vmatpush1.msra.mxu0 0.0
  %49 = vmatprep.subr.mxu0 0.0
  %50 = vmatpush1.msra.mxu0 0.0
  %51 = vmatprep.subr.mxu0 0.0
  %52 = vmatpush1.msra.mxu0 0.0
  %53 = vmatprep.subr.mxu0 0.0
  %54 = vmatpush1.msra.mxu0 0.0
  %55 = vmatprep.subr.mxu0 0.0
  %56 = vmatpush1.msra.mxu0 0.0
  %57 = vmatprep.subr.mxu0 0.0
  %58 = vmatpush1.msra.mxu0 0.0
  %59 = vmatprep.subr.mxu0 0.0
  %60 = vmatpush1.msra.mxu0 0.0
  %61 = vmatprep.subr.mxu0 0.0
  %62 = vmatpush1.msra.mxu0 0.0
  %63 = vmatprep.subr.mxu0 0.0
  %64 = vmatpush1.msra.mxu0 0.0
  %65 = vmatprep.subr.mxu0 0.0
  %66 = vmatpush1.msra.mxu0 %v33
  %67 = vmatprep.subr.mxu0 0.0
  %68 = vmatpush2.msra.mxu0 0.0
  %69 = vmatprep.subr.mxu0 0.0
  %70 = vmatpush2.msra.mxu0 0.0
  %71 = vmatprep.subr.mxu0 0.0
  %72 = vmatpush2.msra.mxu0 0.0
  %73 = vmatprep.subr.mxu0 0.0
  %74 = vmatpush2.msra.mxu0 0.0
  %75 = vmatprep.subr.mxu0 0.0
  %76 = vmatpush2.msra.mxu0 0.0
  %77 = vmatprep.subr.mxu0 0.0
  %78 = vmatpush2.msra.mxu0 0.0
  %79 = vmatprep.subr.mxu0 0.0
  %80 = vmatpush2.msra.mxu0 0.0
  %81 = vmatprep.subr.mxu0 0.0
  %82 = vmatpush2.msra.mxu0 0.0
  %83 = vmatprep.subr.mxu0 0.0
  %84 = vmatpush2.msra.mxu0 0.0
  %85 = vmatprep.subr.mxu0 0.0
  %86 = vmatpush2.msra.mxu0 0.0
  %87 = vmatprep.subr.mxu0 0.0
  %88 = vmatpush2.msra.mxu0 0.0
  %89 = vmatprep.subr.mxu0 0.0
  %90 = vmatpush2.msra.mxu0 0.0
  %91 = vmatprep.subr.mxu0 0.0
  %92 = vmatpush2.msra.mxu0 0.0
  %93 = vmatprep.subr.mxu0 0.0
  %94 = vmatpush2.msra.mxu0 0.0
  %95 = vmatprep.subr.mxu0 0.0
  %96 = vmatpush2.msra.mxu0 0.0
  %97 = vmatprep.subr.mxu0 0.0
  %98 = vmatpush2.msra.mxu0 0.0
  %99 = vmatprep.mubr.f32.mxu0 0.0
  %100 = vmatmul.mubr.f32.gmra.mxu0 %v26
  %v101 = vpop.f32.mrf.mxu0
  %v102 = vadd.f32 %v22, %v101
  %v103 = vpop.f32.mrf.mxu0
  %104 = vmatprep.mubr.f32.mxu0 0.0
  %105 = vmatmul.mubr.f32.gmra.mxu0 %v29
  %v106 = vpop.f32.mrf.mxu0
  %v107 = vadd.f32 %v22, %v106
  %v108 = vpop.f32.mrf.mxu0
  %109 = vdwg.mxu0
  %110 = vst [vmem:[%s3] sm:$0xff] %v102
  %111 = vst [vmem:[%s3 + $0x8] sm:$0xff] %v107
  // Predicated region
  $region14: #{stepper_forward.2} parent=0 // pred_check
    _
  $region15: #{stepper_forward.2} parent=0 // pred_check_branch
    %113 = sbr.rel (0) target = $region17
  $region16: #{stepper_forward.2} parent=0 // pred_region
    _
  $region17: #{stepper_forward.2} parent=0 // pred_fallthru
    _
  // Predicated region
  $region18: #{stepper_forward.2} parent=0 // pred_check
    _
  $region19: #{stepper_forward.2} parent=0 // pred_check_branch
    %115 = sbr.rel (0) target = $region21
  $region20: #{stepper_forward.2} parent=0 // pred_region
    _
  $region21: #{stepper_forward.2} parent=0 // pred_fallthru
    _

// kernel: stepper_forward.3
$region0: #{stepper_forward.3}
  #allocation0 [shape = 'u32[]', space=smem, size = 0x4, offset = 0x4, fixed_abs, tag = 'smem constant byte address 0x4 - core index']
  #allocation1 [shape = 'u32[144,128]{1,0:T(1,128)}', space=vmem, size = 0x12000, scoped, tag = 'internal scratch']
  #allocation2 [shape = 'f32[2,32]{1,0:T(2,128)}', space=vmem, size = 0x400, scoped, tag = 'scratch operand']
  #allocation3 [shape = 'f32[2,32]{1,0:T(2,128)}', space=vmem, size = 0x400, scoped, tag = 'scratch operand']
  #allocation4 [shape = 'f32[2,32]{1,0:T(2,128)}', space=vmem, size = 0x400, scoped, tag = 'scratch operand']
  #allocation5 [shape = 'f32[2,32]{1,0:T(2,128)}', space=vmem, size = 0x400, scoped, tag = 'scratch operand']
  %s0 = inlined_call_operand.vmem [shape: f32[8,2,128], index: 0, kind: input, shape index: {}]
  %s1 = inlined_call_operand.vmem [shape: f32[1,2,32], index: 1, kind: input, shape index: {}]
  %s2 = inlined_call_operand.vmem [shape: f32[1,2,32], index: 2, kind: input, shape index: {}]
  %s3 = inlined_call_operand.vmem [shape: f32[32,128], index: 3, kind: input, shape index: {}]
  %s4 = inlined_call_operand.vmem [shape: f32[32,128], index: 4, kind: input, shape index: {}]
  %s5 = inlined_call_operand.vmem [shape: f32[32,128], index: 5, kind: input, shape index: {}]
  %s6 = inlined_call_operand.vmem [shape: f32[1,128], index: 6, kind: input, shape index: {}]
  %s7 = inlined_call_operand.vmem [shape: f32[32,128], index: 7, kind: input, shape index: {}]
  %s8 = inlined_call_operand.vmem [shape: f32[1,128], index: 8, kind: input, shape index: {}]
  %s9 = inlined_call_operand.vmem [shape: f32[8,2,128], index: 9, kind: output, shape index: {0}]
  %s10 = inlined_call_operand.hbm [shape: f32[1,2,32], index: 10, kind: output, shape index: {1}]
  %s11 = inlined_call_operand.hbm [shape: f32[1,2,32], index: 11, kind: output, shape index: {2}]
  %12 = xla_tuple %s9, %s10, %s11
  %s13 = sld [smem:[#allocation0]]
  $region93: #{stepper_forward.3} parent=0
    _
  %s15 = ssub.s32 1, %s13
  %s16 = scalar_select 0, %s15, %s13
  $region1: #{stepper_forward.3} parent=0
    #allocation6 [shape = 'u8[1024]{0}', space=vmem, size = 0x400, scoped, tag = 'output window, operand 1, single buffered']
    #allocation7 [shape = 's32[2]{0}', space=sflag, size = 0x8, scoped, tag = 'scoped memory for stepper_forward.3']
    #allocation8 [shape = 'u8[1024]{0}', space=vmem, size = 0x400, scoped, tag = 'output window, operand 2, single buffered']
    #allocation9 [shape = 's32[1]{0}', space=sflag, size = 0x4, scoped, tag = 'scoped memory for stepper_forward.3']
    %17 = vsyncpa [#allocation7], 0
    %18 = vsyncpa [#allocation9], 0
    loop: start=0, step=1, limit=10
    $region2: #{stepper_forward.3} parent=1 // loop_pre_header
      _
    $region3: #{stepper_forward.3} parent=1 // loop_header
      %s20 = sphi 0, %s24
      %p21 = scmp.ge.s32.totalorder %s20, 10
      %s30 = sphi 0, %s32
      %s33 = sphi 0, %s30
      %s34 = sphi 0, %s33
      %s50 = sphi 0, %s34
      %s54 = sphi 0, %s54
      %s56 = sphi 0, %s54
      %s57 = sphi 0, %s56
      %s71 = sphi 0, %s57
      %s75 = sphi 0, %s75
      %s77 = sphi 0, %s75
      %s78 = sphi 0, %s77
      %s92 = sphi 0, %s78
      %s96 = sphi 0, %s96
      %s98 = sphi 0, %s96
      %s99 = sphi 0, %s98
      %s113 = sphi 0, %s99
      %s117 = sphi 0, %s117
      %s119 = sphi 0, %s117
      %s120 = sphi 0, %s119
      %s134 = sphi 0, %s120
      %s138 = sphi 0, %s138
      %s140 = sphi 0, %s138
      %s141 = sphi 0, %s140
      %s155 = sphi 0, %s141
      %s159 = sphi 0, %s159
      %s161 = sphi 0, %s159
      %s162 = sphi 0, %s161
      %s176 = sphi 0, %s162
      %s180 = sphi 0, %s180
      %s182 = sphi 0, %s180
      %s183 = sphi 0, %s182
      %s197 = sphi 0, %s183
      %s201 = sphi 0, %s201
      %s203 = sphi 0, %s201
      %s204 = sphi 0, %s203
      %s218 = sphi 0, %s204
      %s224 = sphi 0, %s226
      %s227 = sphi 0, %s224
      %s228 = sphi 0, %s227
      %s244 = sphi 0, %s228
      %s248 = sphi 0, %s248
      %s250 = sphi 0, %s248
      %s251 = sphi 0, %s250
      %s265 = sphi 0, %s251
      %s269 = sphi 0, %s269
      %s271 = sphi 0, %s269
      %s272 = sphi 0, %s271
      %s286 = sphi 0, %s272
    $region4: #{stepper_forward.3} parent=1 // loop_header_branch
      %23 = sbr.rel (%p21) target = $region8
    $region5: #{stepper_forward.3} parent=1 // loop_body
      %s25 = ssub.s32 %s20, 1
      %s26 = ssub.s32 %s20, 2
      %s27 = sadd.s32 %s20, 1
      %s28 = ssub.s32 %s20, %s27
      %p29 = scmp.eq.s32.totalorder %s28, 0
      %s31 = sadd.s32 %s30, 1
      %s32 = scalar_select %p29, %s30, %s31
      %p35 = pneg %p29
      %p36 = scmp.eq.s32.totalorder %s20, 7
      %p37 = por %p35, %p36
      %p38 = scmp.ne.s32.totalorder %s30, %s33
      %p39 = scmp.eq.s32.totalorder %s20, 0
      %p40 = por %p38, %p39
      %p41 = scmp.ne.s32.totalorder %s30, %s33
      %p42 = scmp.eq.s32.totalorder %s25, 7
      %p43 = por %p41, %p42
      %p44 = scmp.ne.s32.totalorder %s33, %s34
      %p45 = scmp.eq.s32.totalorder %s25, 0
      %p46 = por %p44, %p45
      %p47 = scmp.ne.s32.totalorder %s33, %s34
      %p48 = scmp.eq.s32.totalorder %s26, 7
      %p49 = por %p47, %p48
      %p51 = scmp.ne.s32.totalorder %s34, %s50
      %p52 = scmp.eq.s32.totalorder %s26, 0
      %p53 = por %p51, %p52
      %s55 = sadd.s32 %s54, 1
      %p58 = scmp.eq.s32.totalorder %s20, 7
      %p59 = scmp.ne.s32.totalorder %s54, %s56
      %p60 = scmp.eq.s32.totalorder %s20, 0
      %p61 = por %p59, %p60
      %p62 = scmp.ne.s32.totalorder %s54, %s56
      %p63 = scmp.eq.s32.totalorder %s25, 7
      %p64 = por %p62, %p63
      %p65 = scmp.ne.s32.totalorder %s56, %s57
      %p66 = scmp.eq.s32.totalorder %s25, 0
      %p67 = por %p65, %p66
      %p68 = scmp.ne.s32.totalorder %s56, %s57
      %p69 = scmp.eq.s32.totalorder %s26, 7
      %p70 = por %p68, %p69
      %p72 = scmp.ne.s32.totalorder %s57, %s71
      %p73 = scmp.eq.s32.totalorder %s26, 0
      %p74 = por %p72, %p73
      %s76 = sadd.s32 %s75, 1
      %p79 = scmp.eq.s32.totalorder %s20, 7
      %p80 = scmp.ne.s32.totalorder %s75, %s77
      %p81 = scmp.eq.s32.totalorder %s20, 0
      %p82 = por %p80, %p81
      %p83 = scmp.ne.s32.totalorder %s75, %s77
      %p84 = scmp.eq.s32.totalorder %s25, 7
      %p85 = por %p83, %p84
      %p86 = scmp.ne.s32.totalorder %s77, %s78
      %p87 = scmp.eq.s32.totalorder %s25, 0
      %p88 = por %p86, %p87
      %p89 = scmp.ne.s32.totalorder %s77, %s78
      %p90 = scmp.eq.s32.totalorder %s26, 7
      %p91 = por %p89, %p90
      %p93 = scmp.ne.s32.totalorder %s78, %s92
      %p94 = scmp.eq.s32.totalorder %s26, 0
      %p95 = por %p93, %p94
      %s97 = sadd.s32 %s96, 1
      %p100 = scmp.eq.s32.totalorder %s20, 7
      %p101 = scmp.ne.s32.totalorder %s96, %s98
      %p102 = scmp.eq.s32.totalorder %s20, 0
      %p103 = por %p101, %p102
      %p104 = scmp.ne.s32.totalorder %s96, %s98
      %p105 = scmp.eq.s32.totalorder %s25, 7
      %p106 = por %p104, %p105
      %p107 = scmp.ne.s32.totalorder %s98, %s99
      %p108 = scmp.eq.s32.totalorder %s25, 0
      %p109 = por %p107, %p108
      %p110 = scmp.ne.s32.totalorder %s98, %s99
      %p111 = scmp.eq.s32.totalorder %s26, 7
      %p112 = por %p110, %p111
      %p114 = scmp.ne.s32.totalorder %s99, %s113
      %p115 = scmp.eq.s32.totalorder %s26, 0
      %p116 = por %p114, %p115
      %s118 = sadd.s32 %s117, 1
      %p121 = scmp.eq.s32.totalorder %s20, 7
      %p122 = scmp.ne.s32.totalorder %s117, %s119
      %p123 = scmp.eq.s32.totalorder %s20, 0
      %p124 = por %p122, %p123
      %p125 = scmp.ne.s32.totalorder %s117, %s119
      %p126 = scmp.eq.s32.totalorder %s25, 7
      %p127 = por %p125, %p126
      %p128 = scmp.ne.s32.totalorder %s119, %s120
      %p129 = scmp.eq.s32.totalorder %s25, 0
      %p130 = por %p128, %p129
      %p131 = scmp.ne.s32.totalorder %s119, %s120
      %p132 = scmp.eq.s32.totalorder %s26, 7
      %p133 = por %p131, %p132
      %p135 = scmp.ne.s32.totalorder %s120, %s134
      %p136 = scmp.eq.s32.totalorder %s26, 0
      %p137 = por %p135, %p136
      %s139 = sadd.s32 %s138, 1
      %p142 = scmp.eq.s32.totalorder %s20, 7
      %p143 = scmp.ne.s32.totalorder %s138, %s140
      %p144 = scmp.eq.s32.totalorder %s20, 0
      %p145 = por %p143, %p144
      %p146 = scmp.ne.s32.totalorder %s138, %s140
      %p147 = scmp.eq.s32.totalorder %s25, 7
      %p148 = por %p146, %p147
      %p149 = scmp.ne.s32.totalorder %s140, %s141
      %p150 = scmp.eq.s32.totalorder %s25, 0
      %p151 = por %p149, %p150
      %p152 = scmp.ne.s32.totalorder %s140, %s141
      %p153 = scmp.eq.s32.totalorder %s26, 7
      %p154 = por %p152, %p153
      %p156 = scmp.ne.s32.totalorder %s141, %s155
      %p157 = scmp.eq.s32.totalorder %s26, 0
      %p158 = por %p156, %p157
      %s160 = sadd.s32 %s159, 1
      %p163 = scmp.eq.s32.totalorder %s20, 7
      %p164 = scmp.ne.s32.totalorder %s159, %s161
      %p165 = scmp.eq.s32.totalorder %s20, 0
      %p166 = por %p164, %p165
      %p167 = scmp.ne.s32.totalorder %s159, %s161
      %p168 = scmp.eq.s32.totalorder %s25, 7
      %p169 = por %p167, %p168
      %p170 = scmp.ne.s32.totalorder %s161, %s162
      %p171 = scmp.eq.s32.totalorder %s25, 0
      %p172 = por %p170, %p171
      %p173 = scmp.ne.s32.totalorder %s161, %s162
      %p174 = scmp.eq.s32.totalorder %s26, 7
      %p175 = por %p173, %p174
      %p177 = scmp.ne.s32.totalorder %s162, %s176
      %p178 = scmp.eq.s32.totalorder %s26, 0
      %p179 = por %p177, %p178
      %s181 = sadd.s32 %s180, 1
      %p184 = scmp.eq.s32.totalorder %s20, 7
      %p185 = scmp.ne.s32.totalorder %s180, %s182
      %p186 = scmp.eq.s32.totalorder %s20, 0
      %p187 = por %p185, %p186
      %p188 = scmp.ne.s32.totalorder %s180, %s182
      %p189 = scmp.eq.s32.totalorder %s25, 7
      %p190 = por %p188, %p189
      %p191 = scmp.ne.s32.totalorder %s182, %s183
      %p192 = scmp.eq.s32.totalorder %s25, 0
      %p193 = por %p191, %p192
      %p194 = scmp.ne.s32.totalorder %s182, %s183
      %p195 = scmp.eq.s32.totalorder %s26, 7
      %p196 = por %p194, %p195
      %p198 = scmp.ne.s32.totalorder %s183, %s197
      %p199 = scmp.eq.s32.totalorder %s26, 0
      %p200 = por %p198, %p199
      %s202 = sadd.s32 %s201, 1
      %p205 = scmp.eq.s32.totalorder %s20, 7
      %p206 = scmp.ne.s32.totalorder %s201, %s203
      %p207 = scmp.eq.s32.totalorder %s20, 0
      %p208 = por %p206, %p207
      %p209 = scmp.ne.s32.totalorder %s201, %s203
      %p210 = scmp.eq.s32.totalorder %s25, 7
      %p211 = por %p209, %p210
      %p212 = scmp.ne.s32.totalorder %s203, %s204
      %p213 = scmp.eq.s32.totalorder %s25, 0
      %p214 = por %p212, %p213
      %p215 = scmp.ne.s32.totalorder %s203, %s204
      %p216 = scmp.eq.s32.totalorder %s26, 7
      %p217 = por %p215, %p216
      %p219 = scmp.ne.s32.totalorder %s204, %s218
      %p220 = scmp.eq.s32.totalorder %s26, 0
      %p221 = por %p219, %p220
      %s222 = ssub.s32 %s20, %s27
      %p223 = scmp.eq.s32.totalorder %s222, 0
      %s225 = sadd.s32 %s224, 1
      %s226 = scalar_select %p223, %s224, %s225
      %p229 = pneg %p223
      %p230 = scmp.eq.s32.totalorder %s20, 7
      %p231 = por %p229, %p230
      %p232 = scmp.ne.s32.totalorder %s224, %s227
      %p233 = scmp.eq.s32.totalorder %s20, 0
      %p234 = por %p232, %p233
      %p235 = scmp.ne.s32.totalorder %s224, %s227
      %p236 = scmp.eq.s32.totalorder %s25, 7
      %p237 = por %p235, %p236
      %p238 = scmp.ne.s32.totalorder %s227, %s228
      %p239 = scmp.eq.s32.totalorder %s25, 0
      %p240 = por %p238, %p239
      %p241 = scmp.ne.s32.totalorder %s227, %s228
      %p242 = scmp.eq.s32.totalorder %s26, 7
      %p243 = por %p241, %p242
      %p245 = scmp.ne.s32.totalorder %s228, %s244
      %p246 = scmp.eq.s32.totalorder %s26, 0
      %p247 = por %p245, %p246
      %s249 = sadd.s32 %s248, 1
      %p252 = scmp.eq.s32.totalorder %s20, 7
      %p253 = scmp.ne.s32.totalorder %s248, %s250
      %p254 = scmp.eq.s32.totalorder %s20, 0
      %p255 = por %p253, %p254
      %p256 = scmp.ne.s32.totalorder %s248, %s250
      %p257 = scmp.eq.s32.totalorder %s25, 7
      %p258 = por %p256, %p257
      %p259 = scmp.ne.s32.totalorder %s250, %s251
      %p260 = scmp.eq.s32.totalorder %s25, 0
      %p261 = por %p259, %p260
      %p262 = scmp.ne.s32.totalorder %s250, %s251
      %p263 = scmp.eq.s32.totalorder %s26, 7
      %p264 = por %p262, %p263
      %p266 = scmp.ne.s32.totalorder %s251, %s265
      %p267 = scmp.eq.s32.totalorder %s26, 0
      %p268 = por %p266, %p267
      %s270 = sadd.s32 %s269, 1
      %p273 = scmp.eq.s32.totalorder %s20, 7
      %p274 = scmp.ne.s32.totalorder %s269, %s271
      %p275 = scmp.eq.s32.totalorder %s20, 0
      %p276 = por %p274, %p275
      %p277 = scmp.ne.s32.totalorder %s269, %s271
      %p278 = scmp.eq.s32.totalorder %s25, 7
      %p279 = por %p277, %p278
      %p280 = scmp.ne.s32.totalorder %s271, %s272
      %p281 = scmp.eq.s32.totalorder %s25, 0
      %p282 = por %p280, %p281
      %p283 = scmp.ne.s32.totalorder %s271, %s272
      %p284 = scmp.eq.s32.totalorder %s26, 7
      %p285 = por %p283, %p284
      %p287 = scmp.ne.s32.totalorder %s272, %s286
      %p288 = scmp.eq.s32.totalorder %s26, 0
      %p289 = por %p287, %p288
      %p290 = scmp.le.s32.totalorder 1, %s20
      %p291 = scmp.lt.s32.totalorder %s20, 9
      %p292 = pnand %p290, %p291
      %p293 = pneg %p292
      // Predicated region
      $region9: #{stepper_forward.3} parent=5 // pred_check
        _
      $region10: #{stepper_forward.3} parent=5 // pred_check_branch
        %295 = sbr.rel (%p292) target = $region12
      $region11: #{stepper_forward.3} parent=5 // pred_region
        %s296 = ssub.s32 %s20, 1
        // Predicated region
        $region13: #{stepper_forward.3} parent=11 // pred_check
          %p297 = pneg %p67
        $region14: #{stepper_forward.3} parent=11 // pred_check_branch
          %299 = sbr.rel (%p297) target = $region16
        $region15: #{stepper_forward.3} parent=11 // pred_region
          _
        $region16: #{stepper_forward.3} parent=11 // pred_fallthru
          _
        // Predicated region
        $region17: #{stepper_forward.3} parent=11 // pred_check
          %p300 = pneg %p88
        $region18: #{stepper_forward.3} parent=11 // pred_check_branch
          %302 = sbr.rel (%p300) target = $region20
        $region19: #{stepper_forward.3} parent=11 // pred_region
          _
        $region20: #{stepper_forward.3} parent=11 // pred_fallthru
          _
        // Predicated region
        $region21: #{stepper_forward.3} parent=11 // pred_check
          %p303 = pneg %p109
        $region22: #{stepper_forward.3} parent=11 // pred_check_branch
          %305 = sbr.rel (%p303) target = $region24
        $region23: #{stepper_forward.3} parent=11 // pred_region
          _
        $region24: #{stepper_forward.3} parent=11 // pred_fallthru
          _
        // Predicated region
        $region25: #{stepper_forward.3} parent=11 // pred_check
          %p306 = pneg %p130
        $region26: #{stepper_forward.3} parent=11 // pred_check_branch
          %308 = sbr.rel (%p306) target = $region28
        $region27: #{stepper_forward.3} parent=11 // pred_region
          _
        $region28: #{stepper_forward.3} parent=11 // pred_fallthru
          _
        // Predicated region
        $region29: #{stepper_forward.3} parent=11 // pred_check
          %p309 = pneg %p151
        $region30: #{stepper_forward.3} parent=11 // pred_check_branch
          %311 = sbr.rel (%p309) target = $region32
        $region31: #{stepper_forward.3} parent=11 // pred_region
          _
        $region32: #{stepper_forward.3} parent=11 // pred_fallthru
          _
        // Predicated region
        $region33: #{stepper_forward.3} parent=11 // pred_check
          %p312 = pneg %p172
        $region34: #{stepper_forward.3} parent=11 // pred_check_branch
          %314 = sbr.rel (%p312) target = $region36
        $region35: #{stepper_forward.3} parent=11 // pred_region
          _
        $region36: #{stepper_forward.3} parent=11 // pred_fallthru
          _
        // Predicated region
        $region37: #{stepper_forward.3} parent=11 // pred_check
          %p315 = pneg %p193
        $region38: #{stepper_forward.3} parent=11 // pred_check_branch
          %317 = sbr.rel (%p315) target = $region40
        $region39: #{stepper_forward.3} parent=11 // pred_region
          _
        $region40: #{stepper_forward.3} parent=11 // pred_fallthru
          _
        // Predicated region
        $region41: #{stepper_forward.3} parent=11 // pred_check
          %p318 = pneg %p214
        $region42: #{stepper_forward.3} parent=11 // pred_check_branch
          %320 = sbr.rel (%p318) target = $region44
        $region43: #{stepper_forward.3} parent=11 // pred_region
          _
        $region44: #{stepper_forward.3} parent=11 // pred_fallthru
          _
      $region12: #{stepper_forward.3} parent=5 // pred_fallthru
        _
      %p321 = scmp.lt.s32.totalorder %s20, 8
      // Predicated region
      $region45: #{stepper_forward.3} parent=5 // pred_check
        %p322 = pneg %p321
      $region46: #{stepper_forward.3} parent=5 // pred_check_branch
        %324 = sbr.rel (%p322) target = $region48
      $region47: #{stepper_forward.3} parent=5 // pred_region
        // Predicated region
        $region49: #{stepper_forward.3} parent=47 // pred_check
          %p325 = pneg %p40
        $region50: #{stepper_forward.3} parent=47 // pred_check_branch
          %327 = sbr.rel (%p325) target = $region52
        $region51: #{stepper_forward.3} parent=47 // pred_region
          %p328 = scmp.lt.s32.totalorder %s20, 7
          %s329 = scalar_select %p328, %s20, 7
          %s330 = smul.addr %s329, 2
          %s331 = scalar_lea.vmem %s0, %s330
        $region52: #{stepper_forward.3} parent=47 // pred_fallthru
          _
      $region48: #{stepper_forward.3} parent=5 // pred_fallthru
        _
      %p332 = scmp.le.s32.totalorder 1, %s20
      %p333 = scmp.lt.s32.totalorder %s20, 9
      %p334 = pnand %p332, %p333
      %p335 = pneg %p334
      // Predicated region
      $region53: #{stepper_forward.3} parent=5 // pred_check
        _
      $region54: #{stepper_forward.3} parent=5 // pred_check_branch
        %337 = sbr.rel (%p334) target = $region56
      $region55: #{stepper_forward.3} parent=5 // pred_region
        %s338 = ssub.s32 %s20, 1
        %p339 = scmp.lt.s32.totalorder %s25, 7
        %s340 = scalar_select %p339, %s25, 7
        %s341 = smul.addr %s340, 2
        %s342 = scalar_lea.vmem %s0, %s341
        %p343 = pneg %p46
        %p344 = pneg %p43
        %p345 = pneg %p67
        %p346 = pneg %p64
        %p347 = pneg %p88
        %p348 = pneg %p85
        %p349 = pneg %p109
        %p350 = pneg %p106
        %p351 = pneg %p130
        %p352 = pneg %p127
        %p353 = pneg %p151
        %p354 = pneg %p148
        %p355 = pneg %p172
        %p356 = pneg %p169
        %p357 = pneg %p193
        %p358 = pneg %p190
        %p359 = pneg %p214
        %p360 = pneg %p211
        %p361 = pneg %p240
        %p362 = pneg %p237
        %p363 = scmp.lt.s32.totalorder %s25, 7
        %s364 = scalar_select %p363, %s25, 7
        %s365 = smul.addr %s364, 2
        %s366 = scalar_lea.vmem %s9, %s365
        %p367 = pneg %p261
        %p368 = pneg %p258
        %p369 = pneg %p282
        %p370 = pneg %p279
        %p371 = scmp.lt.s32.totalorder %s25, 7
        %s372 = scalar_select %p371, %s25, 7
        %s373 = smul.addr %s372, 2
        %s374 = scalar_lea.vmem %s0, %s373
        %p375 = scmp.lt.s32.totalorder %s25, 7
        %s376 = scalar_select %p375, %s25, 7
        %s377 = smul.addr %s376, 2
        %s378 = scalar_lea.vmem %s9, %s377
        %p379 = scmp.eq.s32.totalorder %s25, 0
        // Predicated region
        $region57: #{stepper_forward.3} parent=55 // pred_check
          %p380 = pneg %p379
        $region58: #{stepper_forward.3} parent=55 // pred_check_branch
          %382 = sbr.rel (%p380) target = $region60
        $region59: #{stepper_forward.3} parent=55 // pred_region
          %v383 = vld [vmem:[%s1] sm:$0x3]
          %vm384 = vcmask 254976
          %385 = vst.msk [vmem:[#allocation2] sm:$0x3] %vm384, %v383
          %v386 = vld [vmem:[%s2] sm:$0x3]
          %387 = vst.msk [vmem:[#allocation3] sm:$0x3] %vm384, %v386
          %388 = vst.msk [vmem:[#allocation4] sm:$0x3] %vm384, 0.0
          %389 = vst.msk [vmem:[#allocation5] sm:$0x3] %vm384, 0.0
        $region60: #{stepper_forward.3} parent=55 // pred_fallthru
          _
        %v390 = vld [vmem:[%s374] sm:$0x3]
        %v391 = vld [vmem:[#allocation2] sm:$0x3]
        %v392 = vld [vmem:[%s3] sm:$0xff]
        %v393 = vld [vmem:[%s3 + $0x8] sm:$0xff]
        %v394 = vld [vmem:[%s3 + $0x10] sm:$0xff]
        %v395 = vld [vmem:[%s3 + $0x18] sm:$0xff]
        %vm396 = vcmask 261120
        %v398 = vsel %vm396, %v391, 0
        %400 = vmatprep.subr.mxu0 0.0
        %401 = vmatpush1.msra.mxu0 0.0
        %402 = vmatprep.subr.mxu0 0.0
        %403 = vmatpush1.msra.mxu0 0.0
        %404 = vmatprep.subr.mxu0 0.0
        %405 = vmatpush1.msra.mxu0 0.0
        %406 = vmatprep.subr.mxu0 0.0
        %407 = vmatpush1.msra.mxu0 0.0
        %408 = vmatprep.subr.mxu0 0.0
        %409 = vmatpush1.msra.mxu0 0.0
        %410 = vmatprep.subr.mxu0 0.0
        %411 = vmatpush1.msra.mxu0 0.0
        %412 = vmatprep.subr.mxu0 0.0
        %413 = vmatpush1.msra.mxu0 0.0
        %414 = vmatprep.subr.mxu0 0.0
        %415 = vmatpush1.msra.mxu0 0.0
        %416 = vmatprep.subr.mxu0 0.0
        %417 = vmatpush1.msra.mxu0 0.0
        %418 = vmatprep.subr.mxu0 0.0
        %419 = vmatpush1.msra.mxu0 0.0
        %420 = vmatprep.subr.mxu0 0.0
        %421 = vmatpush1.msra.mxu0 0.0
        %422 = vmatprep.subr.mxu0 0.0
        %423 = vmatpush1.msra.mxu0 0.0
        %424 = vmatprep.subr.mxu0 0.0
        %425 = vmatpush1.msra.mxu0 %v395
        %426 = vmatprep.subr.mxu0 0.0
        %427 = vmatpush1.msra.mxu0 %v394
        %428 = vmatprep.subr.mxu0 0.0
        %429 = vmatpush1.msra.mxu0 %v393
        %430 = vmatprep.subr.mxu0 0.0
        %431 = vmatpush1.msra.mxu0 %v392
        %432 = vmatprep.subr.mxu0 0.0
        %433 = vmatpush2.msra.mxu0 0.0
        %434 = vmatprep.subr.mxu0 0.0
        %435 = vmatpush2.msra.mxu0 0.0
        %436 = vmatprep.subr.mxu0 0.0
        %437 = vmatpush2.msra.mxu0 0.0
        %438 = vmatprep.subr.mxu0 0.0
        %439 = vmatpush2.msra.mxu0 0.0
        %440 = vmatprep.subr.mxu0 0.0
        %441 = vmatpush2.msra.mxu0 0.0
        %442 = vmatprep.subr.mxu0 0.0
        %443 = vmatpush2.msra.mxu0 0.0
        %444 = vmatprep.subr.mxu0 0.0
        %445 = vmatpush2.msra.mxu0 0.0
        %446 = vmatprep.subr.mxu0 0.0
        %447 = vmatpush2.msra.mxu0 0.0
        %448 = vmatprep.subr.mxu0 0.0
        %449 = vmatpush2.msra.mxu0 0.0
        %450 = vmatprep.subr.mxu0 0.0
        %451 = vmatpush2.msra.mxu0 0.0
        %452 = vmatprep.subr.mxu0 0.0
        %453 = vmatpush2.msra.mxu0 0.0
        %454 = vmatprep.subr.mxu0 0.0
        %455 = vmatpush2.msra.mxu0 0.0
        %456 = vmatprep.subr.mxu0 0.0
        %457 = vmatpush2.msra.mxu0 0.0
        %458 = vmatprep.subr.mxu0 0.0
        %459 = vmatpush2.msra.mxu0 0.0
        %460 = vmatprep.subr.mxu0 0.0
        %461 = vmatpush2.msra.mxu0 0.0
        %462 = vmatprep.subr.mxu0 0.0
        %463 = vmatpush2.msra.mxu0 0.0
        %464 = vmatprep.mubr.f32.mxu0 0.0
        %465 = vmatmul.mubr.f32.gmra.mxu0 %v398
        %v466 = vpop.f32.mrf.mxu0
        %v467 = vadd.f32 0.0, %v466
        %v468 = vpop.f32.mrf.mxu0
        %469 = vdwg.mxu0
        %v470 = vadd.f32 %v390, %v467
        %v471 = vxor.u32 %v470, 2147483648
        %v472 = vmul.f32 %v471, 1.442695
        %v473 = vpow.pop %v472
        %v474 = vadd.f32 %v473, 1.0
        %v475 = vrcp.pop %v474
        %v476 = vmul.f32 1.0, %v475
        %v477 = vtanh.pop %v470
        %v478 = vld [vmem:[#allocation3] sm:$0x3]
        %480 = vrot.lane.b32.xlu0 %v478, 32
        %v481 = vpop.permute.xlu0 %480
        %v483 = vmul.f32 %v476, %v481
        %485 = vrot.lane.b32.xlu0 %v477, 64
        %v486 = vpop.permute.xlu0 %485
        %v488 = vmul.f32 %v476, %v486
        %490 = vrot.lane.b32.xlu0 %v488, 32
        %v491 = vpop.permute.xlu0 %490
        %v493 = vadd.f32 %v483, %v491
        %v494 = vtanh.pop %v493
        %496 = vrot.lane.b32.xlu0 %v494, 64
        %v497 = vpop.permute.xlu0 %496
        %v499 = vmul.f32 %v476, %v497
        %501 = vrot.lane.b32.xlu0 %v499, 32
        %v502 = vpop.permute.xlu0 %501
        %vm504 = vcmask 254976
        %505 = vst.msk [vmem:[#allocation2] sm:$0x3] %vm504, %v502
        %507 = vrot.lane.b32.xlu0 %v493, 96
        %v508 = vpop.permute.xlu0 %507
        %510 = vst.msk [vmem:[#allocation3] sm:$0x3] %vm504, %v508
        %v511 = vmax.f32 %v499, 0.0
        %v512 = vld [vmem:[%s4] sm:$0xff]
        %v513 = vld [vmem:[%s4 + $0x8] sm:$0xff]
        %v514 = vld [vmem:[%s4 + $0x10] sm:$0xff]
        %v515 = vld [vmem:[%s4 + $0x18] sm:$0xff]
        %v516 = vld [vmem:[#allocation4] sm:$0x3]
        %v517 = vld [vmem:[%s5] sm:$0xff]
        %v518 = vld [vmem:[%s5 + $0x8] sm:$0xff]
        %v519 = vld [vmem:[%s5 + $0x10] sm:$0xff]
        %v520 = vld [vmem:[%s5 + $0x18] sm:$0xff]
        %v522 = vsel %vm396, %v516, 0
        %524 = vmatprep.subr.mxu0 0.0
        %525 = vmatpush1.msra.mxu0 0.0
        %526 = vmatprep.subr.mxu0 0.0
        %527 = vmatpush1.msra.mxu0 0.0
        %528 = vmatprep.subr.mxu0 0.0
        %529 = vmatpush1.msra.mxu0 0.0
        %530 = vmatprep.subr.mxu0 0.0
        %531 = vmatpush1.msra.mxu0 0.0
        %532 = vmatprep.subr.mxu0 0.0
        %533 = vmatpush1.msra.mxu0 0.0
        %534 = vmatprep.subr.mxu0 0.0
        %535 = vmatpush1.msra.mxu0 0.0
        %536 = vmatprep.subr.mxu0 0.0
        %537 = vmatpush1.msra.mxu0 0.0
        %538 = vmatprep.subr.mxu0 0.0
        %539 = vmatpush1.msra.mxu0 0.0
        %540 = vmatprep.subr.mxu0 0.0
        %541 = vmatpush1.msra.mxu0 0.0
        %542 = vmatprep.subr.mxu0 0.0
        %543 = vmatpush1.msra.mxu0 0.0
        %544 = vmatprep.subr.mxu0 0.0
        %545 = vmatpush1.msra.mxu0 0.0
        %546 = vmatprep.subr.mxu0 0.0
        %547 = vmatpush1.msra.mxu0 0.0
        %548 = vmatprep.subr.mxu0 0.0
        %549 = vmatpush1.msra.mxu0 %v520
        %550 = vmatprep.subr.mxu0 0.0
        %551 = vmatpush1.msra.mxu0 %v519
        %552 = vmatprep.subr.mxu0 0.0
        %553 = vmatpush1.msra.mxu0 %v518
        %554 = vmatprep.subr.mxu0 0.0
        %555 = vmatpush1.msra.mxu0 %v517
        %556 = vmatprep.subr.mxu0 0.0
        %557 = vmatpush2.msra.mxu0 0.0
        %558 = vmatprep.subr.mxu0 0.0
        %559 = vmatpush2.msra.mxu0 0.0
        %560 = vmatprep.subr.mxu0 0.0
        %561 = vmatpush2.msra.mxu0 0.0
        %562 = vmatprep.subr.mxu0 0.0
        %563 = vmatpush2.msra.mxu0 0.0
        %564 = vmatprep.subr.mxu0 0.0
        %565 = vmatpush2.msra.mxu0 0.0
        %566 = vmatprep.subr.mxu0 0.0
        %567 = vmatpush2.msra.mxu0 0.0
        %568 = vmatprep.subr.mxu0 0.0
        %569 = vmatpush2.msra.mxu0 0.0
        %570 = vmatprep.subr.mxu0 0.0
        %571 = vmatpush2.msra.mxu0 0.0
        %572 = vmatprep.subr.mxu0 0.0
        %573 = vmatpush2.msra.mxu0 0.0
        %574 = vmatprep.subr.mxu0 0.0
        %575 = vmatpush2.msra.mxu0 0.0
        %576 = vmatprep.subr.mxu0 0.0
        %577 = vmatpush2.msra.mxu0 0.0
        %578 = vmatprep.subr.mxu0 0.0
        %579 = vmatpush2.msra.mxu0 0.0
        %580 = vmatprep.subr.mxu0 0.0
        %581 = vmatpush2.msra.mxu0 0.0
        %582 = vmatprep.subr.mxu0 0.0
        %583 = vmatpush2.msra.mxu0 0.0
        %584 = vmatprep.subr.mxu0 0.0
        %585 = vmatpush2.msra.mxu0 0.0
        %586 = vmatprep.subr.mxu0 0.0
        %587 = vmatpush2.msra.mxu0 0.0
        %588 = vmatprep.mubr.f32.mxu0 0.0
        %589 = vmatmul.mubr.f32.gmra.mxu0 %v522
        %v590 = vpop.f32.mrf.mxu0
        %v591 = vadd.f32 0.0, %v590
        %v592 = vpop.f32.mrf.mxu0
        %593 = vdwg.mxu0
        %595 = vrot.lane.b32.xlu0 %v511, 32
        %v596 = vpop.permute.xlu0 %595
        %v597 = vsel %vm396, %v596, 0
        %599 = vmatprep.subr.mxu0 0.0
        %600 = vmatpush1.msra.mxu0 0.0
        %601 = vmatprep.subr.mxu0 0.0
        %602 = vmatpush1.msra.mxu0 0.0
        %603 = vmatprep.subr.mxu0 0.0
        %604 = vmatpush1.msra.mxu0 0.0
        %605 = vmatprep.subr.mxu0 0.0
        %606 = vmatpush1.msra.mxu0 0.0
        %607 = vmatprep.subr.mxu0 0.0
        %608 = vmatpush1.msra.mxu0 0.0
        %609 = vmatprep.subr.mxu0 0.0
        %610 = vmatpush1.msra.mxu0 0.0
        %611 = vmatprep.subr.mxu0 0.0
        %612 = vmatpush1.msra.mxu0 0.0
        %613 = vmatprep.subr.mxu0 0.0
        %614 = vmatpush1.msra.mxu0 0.0
        %615 = vmatprep.subr.mxu0 0.0
        %616 = vmatpush1.msra.mxu0 0.0
        %617 = vmatprep.subr.mxu0 0.0
        %618 = vmatpush1.msra.mxu0 0.0
        %619 = vmatprep.subr.mxu0 0.0
        %620 = vmatpush1.msra.mxu0 0.0
        %621 = vmatprep.subr.mxu0 0.0
        %622 = vmatpush1.msra.mxu0 0.0
        %623 = vmatprep.subr.mxu0 0.0
        %624 = vmatpush1.msra.mxu0 %v515
        %625 = vmatprep.subr.mxu0 0.0
        %626 = vmatpush1.msra.mxu0 %v514
        %627 = vmatprep.subr.mxu0 0.0
        %628 = vmatpush1.msra.mxu0 %v513
        %629 = vmatprep.subr.mxu0 0.0
        %630 = vmatpush1.msra.mxu0 %v512
        %631 = vmatprep.subr.mxu0 0.0
        %632 = vmatpush2.msra.mxu0 0.0
        %633 = vmatprep.subr.mxu0 0.0
        %634 = vmatpush2.msra.mxu0 0.0
        %635 = vmatprep.subr.mxu0 0.0
        %636 = vmatpush2.msra.mxu0 0.0
        %637 = vmatprep.subr.mxu0 0.0
        %638 = vmatpush2.msra.mxu0 0.0
        %639 = vmatprep.subr.mxu0 0.0
        %640 = vmatpush2.msra.mxu0 0.0
        %641 = vmatprep.subr.mxu0 0.0
        %642 = vmatpush2.msra.mxu0 0.0
        %643 = vmatprep.subr.mxu0 0.0
        %644 = vmatpush2.msra.mxu0 0.0
        %645 = vmatprep.subr.mxu0 0.0
        %646 = vmatpush2.msra.mxu0 0.0
        %647 = vmatprep.subr.mxu0 0.0
        %648 = vmatpush2.msra.mxu0 0.0
        %649 = vmatprep.subr.mxu0 0.0
        %650 = vmatpush2.msra.mxu0 0.0
        %651 = vmatprep.subr.mxu0 0.0
        %652 = vmatpush2.msra.mxu0 0.0
        %653 = vmatprep.subr.mxu0 0.0
        %654 = vmatpush2.msra.mxu0 0.0
        %655 = vmatprep.subr.mxu0 0.0
        %656 = vmatpush2.msra.mxu0 0.0
        %657 = vmatprep.subr.mxu0 0.0
        %658 = vmatpush2.msra.mxu0 0.0
        %659 = vmatprep.subr.mxu0 0.0
        %660 = vmatpush2.msra.mxu0 0.0
        %661 = vmatprep.subr.mxu0 0.0
        %662 = vmatpush2.msra.mxu0 0.0
        %663 = vmatprep.mubr.f32.mxu0 0.0
        %664 = vmatmul.mubr.f32.gmra.mxu0 %v597
        %v665 = vpop.f32.mrf.mxu0
        %v666 = vadd.f32 %v591, %v665
        %v667 = vpop.f32.mrf.mxu0
        %668 = vdwg.mxu0
        %v669 = vld [vmem:[%s6] sm:$0x1]
        %v671 = vlaneseq
        %v672 = vshrl.u32 %v671, 7
        %v673 = vsub.s32 0, %v672
        %v674 = vrot.slane %v669, %v673
        %v676 = vadd.f32 %v666, %v674
        %v677 = vxor.u32 %v676, 2147483648
        %v678 = vmul.f32 %v677, 1.442695
        %v679 = vpow.pop %v678
        %v680 = vadd.f32 %v679, 1.0
        %v681 = vrcp.pop %v680
        %v682 = vmul.f32 1.0, %v681
        %v683 = vtanh.pop %v676
        %v684 = vld [vmem:[#allocation5] sm:$0x3]
        %686 = vrot.lane.b32.xlu0 %v684, 32
        %v687 = vpop.permute.xlu0 %686
        %v689 = vmul.f32 %v682, %v687
        %691 = vrot.lane.b32.xlu0 %v683, 64
        %v692 = vpop.permute.xlu0 %691
        %v694 = vmul.f32 %v682, %v692
        %696 = vrot.lane.b32.xlu0 %v694, 32
        %v697 = vpop.permute.xlu0 %696
        %v699 = vadd.f32 %v689, %v697
        %v700 = vtanh.pop %v699
        %702 = vrot.lane.b32.xlu0 %v700, 64
        %v703 = vpop.permute.xlu0 %702
        %v705 = vmul.f32 %v682, %v703
        %707 = vrot.lane.b32.xlu0 %v705, 32
        %v708 = vpop.permute.xlu0 %707
        %710 = vst.msk [vmem:[#allocation4] sm:$0x3] %vm504, %v708
        %712 = vrot.lane.b32.xlu0 %v699, 96
        %v713 = vpop.permute.xlu0 %712
        %715 = vst.msk [vmem:[#allocation5] sm:$0x3] %vm504, %v713
        %v716 = vmax.f32 %v705, 0.0
        %v717 = vld [vmem:[%s7] sm:$0xff]
        %v718 = vld [vmem:[%s7 + $0x8] sm:$0xff]
        %v719 = vld [vmem:[%s7 + $0x10] sm:$0xff]
        %v720 = vld [vmem:[%s7 + $0x18] sm:$0xff]
        %v721 = vld [vmem:[%s8] sm:$0x1]
        %v723 = vlaneseq
        %v724 = vshrl.u32 %v723, 7
        %v725 = vsub.s32 0, %v724
        %v726 = vrot.slane %v721, %v725
        %729 = vrot.lane.b32.xlu0 %v716, 32
        %v730 = vpop.permute.xlu0 %729
        %v731 = vsel %vm396, %v730, 0
        %733 = vmatprep.subr.mxu0 0.0
        %734 = vmatpush1.msra.mxu0 0.0
        %735 = vmatprep.subr.mxu0 0.0
        %736 = vmatpush1.msra.mxu0 0.0
        %737 = vmatprep.subr.mxu0 0.0
        %738 = vmatpush1.msra.mxu0 0.0
        %739 = vmatprep.subr.mxu0 0.0
        %740 = vmatpush1.msra.mxu0 0.0
        %741 = vmatprep.subr.mxu0 0.0
        %742 = vmatpush1.msra.mxu0 0.0
        %743 = vmatprep.subr.mxu0 0.0
        %744 = vmatpush1.msra.mxu0 0.0
        %745 = vmatprep.subr.mxu0 0.0
        %746 = vmatpush1.msra.mxu0 0.0
        %747 = vmatprep.subr.mxu0 0.0
        %748 = vmatpush1.msra.mxu0 0.0
        %749 = vmatprep.subr.mxu0 0.0
        %750 = vmatpush1.msra.mxu0 0.0
        %751 = vmatprep.subr.mxu0 0.0
        %752 = vmatpush1.msra.mxu0 0.0
        %753 = vmatprep.subr.mxu0 0.0
        %754 = vmatpush1.msra.mxu0 0.0
        %755 = vmatprep.subr.mxu0 0.0
        %756 = vmatpush1.msra.mxu0 0.0
        %757 = vmatprep.subr.mxu0 0.0
        %758 = vmatpush1.msra.mxu0 %v720
        %759 = vmatprep.subr.mxu0 0.0
        %760 = vmatpush1.msra.mxu0 %v719
        %761 = vmatprep.subr.mxu0 0.0
        %762 = vmatpush1.msra.mxu0 %v718
        %763 = vmatprep.subr.mxu0 0.0
        %764 = vmatpush1.msra.mxu0 %v717
        %765 = vmatprep.subr.mxu0 0.0
        %766 = vmatpush2.msra.mxu0 0.0
        %767 = vmatprep.subr.mxu0 0.0
        %768 = vmatpush2.msra.mxu0 0.0
        %769 = vmatprep.subr.mxu0 0.0
        %770 = vmatpush2.msra.mxu0 0.0
        %771 = vmatprep.subr.mxu0 0.0
        %772 = vmatpush2.msra.mxu0 0.0
        %773 = vmatprep.subr.mxu0 0.0
        %774 = vmatpush2.msra.mxu0 0.0
        %775 = vmatprep.subr.mxu0 0.0
        %776 = vmatpush2.msra.mxu0 0.0
        %777 = vmatprep.subr.mxu0 0.0
        %778 = vmatpush2.msra.mxu0 0.0
        %779 = vmatprep.subr.mxu0 0.0
        %780 = vmatpush2.msra.mxu0 0.0
        %781 = vmatprep.subr.mxu0 0.0
        %782 = vmatpush2.msra.mxu0 0.0
        %783 = vmatprep.subr.mxu0 0.0
        %784 = vmatpush2.msra.mxu0 0.0
        %785 = vmatprep.subr.mxu0 0.0
        %786 = vmatpush2.msra.mxu0 0.0
        %787 = vmatprep.subr.mxu0 0.0
        %788 = vmatpush2.msra.mxu0 0.0
        %789 = vmatprep.subr.mxu0 0.0
        %790 = vmatpush2.msra.mxu0 0.0
        %791 = vmatprep.subr.mxu0 0.0
        %792 = vmatpush2.msra.mxu0 0.0
        %793 = vmatprep.subr.mxu0 0.0
        %794 = vmatpush2.msra.mxu0 0.0
        %795 = vmatprep.subr.mxu0 0.0
        %796 = vmatpush2.msra.mxu0 0.0
        %797 = vmatprep.mubr.f32.mxu0 0.0
        %798 = vmatmul.mubr.f32.gmra.mxu0 %v731
        %v799 = vpop.f32.mrf.mxu0
        %v800 = vadd.f32 %v726, %v799
        %v801 = vpop.f32.mrf.mxu0
        %802 = vdwg.mxu0
        %803 = vst [vmem:[%s378] sm:$0x3] %v800
        %p804 = scmp.eq.s32.totalorder %s25, 7
        // Predicated region
        $region61: #{stepper_forward.3} parent=55 // pred_check
          %p805 = pneg %p804
        $region62: #{stepper_forward.3} parent=55 // pred_check_branch
          %807 = sbr.rel (%p805) target = $region64
        $region63: #{stepper_forward.3} parent=55 // pred_region
          %808 = vst.msk [vmem:[#allocation6] sm:$0x3] %vm504, %v708
          %809 = vst.msk [vmem:[#allocation8] sm:$0x3] %vm504, %v713
        $region64: #{stepper_forward.3} parent=55 // pred_fallthru
          _
        %p810 = scmp.lt.s32.totalorder %s25, 7
        %s811 = scalar_select %p810, %s25, 7
        %s812 = smul.addr %s811, 2
        %s813 = scalar_lea.vmem %s9, %s812
        // Predicated region
        $region65: #{stepper_forward.3} parent=55 // pred_check
          %p814 = pneg %p237
        $region66: #{stepper_forward.3} parent=55 // pred_check_branch
          %816 = sbr.rel (%p814) target = $region68
        $region67: #{stepper_forward.3} parent=55 // pred_region
          _
        $region68: #{stepper_forward.3} parent=55 // pred_fallthru
          _
        // Predicated region
        $region69: #{stepper_forward.3} parent=55 // pred_check
          %p817 = pneg %p258
        $region70: #{stepper_forward.3} parent=55 // pred_check_branch
          %819 = sbr.rel (%p817) target = $region72
        $region71: #{stepper_forward.3} parent=55 // pred_region
          %s821 = ssub.s32 32, 32
          %822 = vsyncadd [#allocation7], %s821
          %s824 = sshll.u32 [#allocation6], 4
          %s825 = int_to_ptr.vmem [resolvable:$true] %s824
          %827 = dma.vmem_to_hbm [thread:$0]  %s825, 32, %s10, [#allocation7]
        $region72: #{stepper_forward.3} parent=55 // pred_fallthru
          _
        // Predicated region
        $region73: #{stepper_forward.3} parent=55 // pred_check
          %p828 = pneg %p279
        $region74: #{stepper_forward.3} parent=55 // pred_check_branch
          %830 = sbr.rel (%p828) target = $region76
        $region75: #{stepper_forward.3} parent=55 // pred_region
          %s832 = ssub.s32 32, 32
          %833 = vsyncadd [#allocation9], %s832
          %s835 = sshll.u32 [#allocation8], 4
          %s836 = int_to_ptr.vmem [resolvable:$true] %s835
          %838 = dma.vmem_to_hbm [thread:$0]  %s836, 32, %s11, [#allocation9]
        $region76: #{stepper_forward.3} parent=55 // pred_fallthru
          _
        // Predicated region
        $region77: #{stepper_forward.3} parent=55 // pred_check
          %p839 = pneg %p258
        $region78: #{stepper_forward.3} parent=55 // pred_check_branch
          %841 = sbr.rel (%p839) target = $region80
        $region79: #{stepper_forward.3} parent=55 // pred_region
          %842 = dma.done [#allocation7], 32
        $region80: #{stepper_forward.3} parent=55 // pred_fallthru
          _
        // Predicated region
        $region81: #{stepper_forward.3} parent=55 // pred_check
          %p843 = pneg %p279
        $region82: #{stepper_forward.3} parent=55 // pred_check_branch
          %845 = sbr.rel (%p843) target = $region84
        $region83: #{stepper_forward.3} parent=55 // pred_region
          %846 = dma.done [#allocation9], 32
        $region84: #{stepper_forward.3} parent=55 // pred_fallthru
          _
      $region56: #{stepper_forward.3} parent=5 // pred_fallthru
        _
      %p847 = scmp.le.s32.totalorder 2, %s20
      // Predicated region
      $region85: #{stepper_forward.3} parent=5 // pred_check
        %p848 = pneg %p847
      $region86: #{stepper_forward.3} parent=5 // pred_check_branch
        %850 = sbr.rel (%p848) target = $region88
      $region87: #{stepper_forward.3} parent=5 // pred_region
        %s851 = ssub.s32 %s20, 2
        // Predicated region
        $region89: #{stepper_forward.3} parent=87 // pred_check
          %p852 = pneg %p243
        $region90: #{stepper_forward.3} parent=87 // pred_check_branch
          %854 = sbr.rel (%p852) target = $region92
        $region91: #{stepper_forward.3} parent=87 // pred_region
          %p855 = scmp.lt.s32.totalorder %s26, 7
          %s856 = scalar_select %p855, %s26, 7
          %s857 = smul.addr %s856, 2
          %s858 = scalar_lea.vmem %s9, %s857
        $region92: #{stepper_forward.3} parent=87 // pred_fallthru
          _
      $region88: #{stepper_forward.3} parent=5 // pred_fallthru
        _
    $region6: #{stepper_forward.3} parent=1 // loop_footer
      %s24 = sadd.s32 1, %s20
    $region7: #{stepper_forward.3} parent=1 // loop_footer_branch
      %19 = sbr.rel target = $region3
    $region8: #{stepper_forward.3} parent=1 // loop_exit
      _
    %859 = vsyncpa [#allocation7], 1
    %s860 = scalar_lea.sflag [#allocation7], 1
    %861 = vsyncpa %s860, 1
    %862 = vsyncpa [#allocation9], 1

</llo_original>
